<compile_context>
chip_gen: v6e
topology: v6e:2x2x1
jax: 0.10.0
libtpu: 0.0.40
codegen_flags: <defaults>
</compile_context>

<pallas_src>
import functools
import jax
import jax.numpy as jnp
from jax.experimental import pallas as pl
from jax.experimental.pallas import tpu as pltpu


# ----------------------------- global knobs -----------------------------

# Explicit scoped-VMEM ceiling: <= the v6e/v7x defaults, deliberately above v5e's 16 MiB
# default so the resident MLP weights + 256-row tiles keep 2-deep pipelining everywhere.
_VMEM_LIMIT_BYTES = 32 * 1024 * 1024

_SINGLE_BUFFER_OK = None   # lazily/eagerly probed: does this Pallas accept pl.Buffered(1)?


def _probe_single_buffer():
    """Eagerly check whether pl.BlockSpec(..., pipeline_mode=pl.Buffered(1)) compiles & runs.

    Grid-invariant weights don't need double buffers; single-buffering halves their resident
    VMEM.  If the installed Pallas rejects it we silently fall back to default buffering.
    Must be called eagerly (outside any jit trace) so failures are catchable here.
    """
    global _SINGLE_BUFFER_OK
    if _SINGLE_BUFFER_OK is not None:
        return _SINGLE_BUFFER_OK
    try:
        def _k(x_ref, o_ref):
            o_ref[...] = x_ref[...] + 1.0

        f = pl.pallas_call(
            _k,
            out_shape=jax.ShapeDtypeStruct((8, 128), jnp.float32),
            grid=(2,),
            in_specs=[pl.BlockSpec((8, 128), lambda i: (0, 0),
                                   pipeline_mode=pl.Buffered(1))],
            out_specs=pl.BlockSpec((8, 128), lambda i: (0, 0)),
        )
        jax.block_until_ready(f(jnp.zeros((8, 128), jnp.float32)))
        _SINGLE_BUFFER_OK = True
    except Exception:   # version without pipeline_mode / Buffered(1): fall back safely
        _SINGLE_BUFFER_OK = False
    return _SINGLE_BUFFER_OK


def _resident_spec(block_shape, index_map):
    """BlockSpec for a grid-invariant operand (weights/biases): single-buffered if supported."""
    if _SINGLE_BUFFER_OK:
        return pl.BlockSpec(block_shape, index_map, pipeline_mode=pl.Buffered(1))
    return pl.BlockSpec(block_shape, index_map)


def _row_tile(m, max_tile=256):
    """Row tile for the dense kernels.

    Multiple of 8 (sublane granularity) dividing `m`, capped at `max_tile` (VMEM headroom on
    v7x/v5e), and chosen so the grid has >= 2 steps whenever possible (keeps both v7x
    TensorCores busy).  Falls back to the whole array for tiny / unaligned M.
    """
    if m <= 8 or m % 8 != 0:
        # TODO(synk): for real CLIP shapes pad M = B*S (S=77) up to a multiple of 8 in the
        # wrapper instead of collapsing to a single full-array block.
        return m
    target = min(max_tile, m // 2)
    t = target - (target % 8)
    while t >= 8:
        if m % t == 0:
            return t
        t -= 8
    return m


# ----------------------------- Pallas kernels -----------------------------

def _ln_qkv_kernel(x_ref, g_ref, b_ref, w_ref, bias_ref, o_ref):
    """LayerNorm (f32 stats) fused into the prologue of the QKV projection (bf16 MXU, f32 acc)."""
    x = x_ref[...].astype(jnp.float32)
    mean = jnp.mean(x, axis=-1, keepdims=True)
    xc = x - mean
    var = jnp.mean(xc * xc, axis=-1, keepdims=True)
    h = xc * jax.lax.rsqrt(var + 1e-5) * g_ref[...] + b_ref[...]
    y = jnp.dot(h.astype(w_ref.dtype), w_ref[...], preferred_element_type=jnp.float32)
    o_ref[...] = (y + bias_ref[...]).astype(o_ref.dtype)


def ln_qkv(x2d, gamma, beta, w, bias):
    M, K = x2d.shape
    N = w.shape[1]
    tm = _row_tile(M)
    return pl.pallas_call(
        _ln_qkv_kernel,
        out_shape=jax.ShapeDtypeStruct((M, N), jnp.bfloat16),
        grid=(M // tm,),
        in_specs=[pl.BlockSpec((tm, K), lambda i: (i, 0)),
                  _resident_spec((1, K), lambda i: (0, 0)),
                  _resident_spec((1, K), lambda i: (0, 0)),
                  _resident_spec((K, N), lambda i: (0, 0)),   # grid-invariant -> VMEM resident
                  _resident_spec((1, N), lambda i: (0, 0))],
        out_specs=pl.BlockSpec((tm, N), lambda i: (i, 0)),
        compiler_params=pltpu.CompilerParams(
            dimension_semantics=("parallel",),
            vmem_limit_bytes=_VMEM_LIMIT_BYTES),
    )(x2d, gamma.reshape(1, K), beta.reshape(1, K), w, bias.reshape(1, N))


def _attn_kernel(qkv_ref, mask_ref, resid_ref, wo_ref, bo_ref, o_ref, *, H, Dh):
    """Per-batch attention (all heads) with fused out-projection + residual epilogue.

    qkv_ref:  [S, 3D]    bf16 (Q pre-scaled)     mask_ref: [1, S]  int32 padding mask
    resid_ref:[S, D]     residual stream          wo_ref:  [H, Dh, D] bf16   bo_ref: [1, D] f32
    Heads are gathered onto a leading batch axis once (in-VMEM, no HBM traffic) and every
    matmul runs head-batched; the single [S, D] output store is lane-dense (no concat).
    """
    S = qkv_ref.shape[0]
    D = H * Dh
    qkv = qkv_ref[...]

    # causal + padding mask built in-kernel (no [B,1,S,S] bias in HBM)
    rows = jax.lax.broadcasted_iota(jnp.int32, (S, S), 0)
    cols = jax.lax.broadcasted_iota(jnp.int32, (S, S), 1)
    keep = (cols <= rows) & (mask_ref[...] > 0)               # (S,S) & (1,S) -> (S,S)
    mbias = jnp.where(keep, 0.0, -1e9).astype(jnp.float32)

    def heads(base):   # [S, D] lane slab -> [H, S, Dh] head-batched layout
        return jnp.stack([qkv[:, base + h * Dh: base + (h + 1) * Dh] for h in range(H)], axis=0)

    q = heads(0)            # scale already folded into the Q weights/bias
    k = heads(D)
    v = heads(2 * D)

    # head-batched QK^T (no materialized k.T), softmax in f32
    s = jnp.einsum('hqd,hkd->hqk', q, k, preferred_element_type=jnp.float32)     # [H,S,S]
    s = s + mbias[None]
    m = jnp.max(s, axis=-1, keepdims=True)
    p = jnp.exp(s - m)
    p = p * pl.reciprocal(jnp.sum(p, axis=-1, keepdims=True), approx=True)        # EUP slot

    ctx = jnp.einsum('hqk,hkd->hqd', p.astype(v.dtype), v,
                     preferred_element_type=jnp.float32)                          # [H,S,Dh]

    # fused out-projection (per-head [Dh,D] weight slabs) + bias + residual, summed over heads
    proj = jnp.einsum('hqd,hdn->hqn', ctx.astype(wo_ref.dtype), wo_ref[...],
                      preferred_element_type=jnp.float32)                         # [H,S,D]
    y = jnp.sum(proj, axis=0) + bo_ref[...] + resid_ref[...].astype(jnp.float32)  # [S,D] f32
    o_ref[...] = y.astype(o_ref.dtype)


def attention_block(qkv, mask3, resid, wo_hdd, bo, H, Dh):
    """qkv: [B,S,3D] bf16; mask3: [B,1,S] i32; resid: [B,S,D]; wo_hdd: [H,Dh,D] bf16."""
    B, S, threeD = qkv.shape
    D = H * Dh
    kern = functools.partial(_attn_kernel, H=H, Dh=Dh)
    # TODO(synk): for B == 1 (or odd B) on v7x add a head-group grid axis so both TCs stay busy.
    return pl.pallas_call(
        kern,
        out_shape=jax.ShapeDtypeStruct((B, S, D), resid.dtype),
        grid=(B,),
        in_specs=[pl.BlockSpec((None, S, threeD), lambda b: (b, 0, 0)),
                  pl.BlockSpec((None, 1, S), lambda b: (b, 0, 0)),
                  pl.BlockSpec((None, S, D), lambda b: (b, 0, 0)),
                  _resident_spec((H, Dh, D), lambda b: (0, 0, 0)),  # out-proj weight, resident
                  _resident_spec((1, D), lambda b: (0, 0))],
        out_specs=pl.BlockSpec((None, S, D), lambda b: (b, 0, 0)),
        compiler_params=pltpu.CompilerParams(
            dimension_semantics=("parallel",),
            vmem_limit_bytes=_VMEM_LIMIT_BYTES),
    )(qkv, mask3, resid, wo_hdd, bo.reshape(1, D))


def _ln_mlp_kernel(x_ref, g_ref, b_ref, w1_ref, b1_ref, w2_ref, b2_ref, o_ref):
    """LayerNorm -> w1 -> QuickGELU -> w2 -> residual, fully fused.

    The [rows, I] intermediate never leaves VMEM and the residual is x_ref itself
    (read once, serving both the LN prologue and the residual add).
    """
    x = x_ref[...].astype(jnp.float32)
    mean = jnp.mean(x, axis=-1, keepdims=True)
    xc = x - mean
    var = jnp.mean(xc * xc, axis=-1, keepdims=True)
    h = xc * jax.lax.rsqrt(var + 1e-5) * g_ref[...] + b_ref[...]
    u = jnp.dot(h.astype(w1_ref.dtype), w1_ref[...], preferred_element_type=jnp.float32)
    u = u + b1_ref[...]
    # CLIP QuickGELU: u * sigmoid(1.702*u); the divide runs on the EUP (approx reciprocal)
    u = u * pl.reciprocal(1.0 + jnp.exp(-1.702 * u), approx=True)
    y = jnp.dot(u.astype(w2_ref.dtype), w2_ref[...], preferred_element_type=jnp.float32)
    o_ref[...] = (y + b2_ref[...] + x).astype(o_ref.dtype)


def ln_mlp_residual(x2d, gamma, beta, w1, b1, w2, b2):
    M, K = x2d.shape
    I = w1.shape[1]
    tm = _row_tile(M)
    return pl.pallas_call(
        _ln_mlp_kernel,
        out_shape=jax.ShapeDtypeStruct((M, K), x2d.dtype),
        grid=(M // tm,),
        in_specs=[pl.BlockSpec((tm, K), lambda i: (i, 0)),
                  _resident_spec((1, K), lambda i: (0, 0)),
                  _resident_spec((1, K), lambda i: (0, 0)),
                  _resident_spec((K, I), lambda i: (0, 0)),   # w1 resident in VMEM
                  _resident_spec((1, I), lambda i: (0, 0)),
                  _resident_spec((I, K), lambda i: (0, 0)),   # w2 resident in VMEM
                  _resident_spec((1, K), lambda i: (0, 0))],
        out_specs=pl.BlockSpec((tm, K), lambda i: (i, 0)),
        compiler_params=pltpu.CompilerParams(
            dimension_semantics=("parallel",),
            vmem_limit_bytes=_VMEM_LIMIT_BYTES),
    )(x2d, gamma.reshape(1, K), beta.reshape(1, K), w1, b1.reshape(1, I), w2, b2.reshape(1, K))


def _ln_proj_norm_kernel(x_ref, g_ref, b_ref, w_ref, o_ref):
    """Final LayerNorm -> text_projection (no bias) -> L2 normalize, fused (f32 reductions)."""
    x = x_ref[...].astype(jnp.float32)
    mean = jnp.mean(x, axis=-1, keepdims=True)
    xc = x - mean
    var = jnp.mean(xc * xc, axis=-1, keepdims=True)
    h = xc * jax.lax.rsqrt(var + 1e-5) * g_ref[...] + b_ref[...]
    y = jnp.dot(h.astype(w_ref.dtype), w_ref[...], preferred_element_type=jnp.float32)
    # torch.nn.functional.normalize: x / max(||x||_2, eps), eps=1e-12 (exact f32 divide)
    nrm = jnp.sqrt(jnp.sum(y * y, axis=-1, keepdims=True))
    o_ref[...] = (y / jnp.maximum(nrm, 1e-12)).astype(o_ref.dtype)


def ln_project_normalize(pooled, gamma, beta, w_proj):
    B, D = pooled.shape
    P = w_proj.shape[1]
    return pl.pallas_call(
        _ln_proj_norm_kernel,
        out_shape=jax.ShapeDtypeStruct((B, P), jnp.float32),
        in_specs=[pl.BlockSpec((B, D), lambda: (0, 0)),
                  pl.BlockSpec((1, D), lambda: (0, 0)),
                  pl.BlockSpec((1, D), lambda: (0, 0)),
                  pl.BlockSpec((D, P), lambda: (0, 0))],
        out_specs=pl.BlockSpec((B, P), lambda: (0, 0)),
        compiler_params=pltpu.CompilerParams(vmem_limit_bytes=_VMEM_LIMIT_BYTES),
    )(pooled, gamma.reshape(1, D), beta.reshape(1, D), w_proj)


# ----------------------------- model glue -----------------------------

CFG = dict(vocab=99, max_pos=16, hidden=32, heads=4, layers=2, inter=64, proj=16)


def init_params(key, cfg):
    D, I, P = cfg["hidden"], cfg["inter"], cfg["proj"]
    keys = iter(jax.random.split(key, 64))
    std = 0.02

    def w(shape):
        return (std * jax.random.normal(next(keys), shape)).astype(jnp.float32)

    params = {
        "tok_emb": w((cfg["vocab"], D)),
        "pos_emb": w((cfg["max_pos"], D)),
        "lnf_g": jnp.ones((D,), jnp.float32),
        "lnf_b": jnp.zeros((D,), jnp.float32),
        "proj_w": w((D, P)),  # text_projection: Linear(D, P, bias=False), stored [in,out]
        "layers": [],
    }
    for _ in range(cfg["layers"]):
        params["layers"].append({
            "ln1_g": jnp.ones((D,), jnp.float32), "ln1_b": jnp.zeros((D,), jnp.float32),
            "wq": w((D, D)), "bq": jnp.zeros((D,), jnp.float32),
            "wk": w((D, D)), "bk": jnp.zeros((D,), jnp.float32),
            "wv": w((D, D)), "bv": jnp.zeros((D,), jnp.float32),
            "wo": w((D, D)), "bo": jnp.zeros((D,), jnp.float32),
            "ln2_g": jnp.ones((D,), jnp.float32), "ln2_b": jnp.zeros((D,), jnp.float32),
            "w1": w((D, I)), "b1": jnp.zeros((I,), jnp.float32),
            "w2": w((I, D)), "b2": jnp.zeros((D,), jnp.float32),
        })
    return params


def prepare_params(params, cfg):
    """Fuse QKV weights, fold the attention scale into Q, reshape wo to per-head [H,Dh,D]
    slabs for the fused out-projection, and cast matmul weights to bf16."""
    _probe_single_buffer()   # eager probe for pl.Buffered(1) support (safe fallback)
    D, H = cfg["hidden"], cfg["heads"]
    Dh = D // H
    scale = 1.0 / (Dh ** 0.5)
    prepped = {
        "tok_emb": params["tok_emb"],
        "pos_emb": params["pos_emb"],
        "lnf_g": params["lnf_g"], "lnf_b": params["lnf_b"],
        "proj_w": params["proj_w"].astype(jnp.bfloat16),
        "layers": [],
    }
    for lyr in params["layers"]:
        wqkv = jnp.concatenate([lyr["wq"] * scale, lyr["wk"], lyr["wv"]], axis=1)
        bqkv = jnp.concatenate([lyr["bq"] * scale, lyr["bk"], lyr["bv"]], axis=0)
        prepped["layers"].append({
            "ln1_g": lyr["ln1_g"], "ln1_b": lyr["ln1_b"],
            "wqkv": wqkv.astype(jnp.bfloat16), "bqkv": bqkv,
            "wo": lyr["wo"].astype(jnp.bfloat16).reshape(H, Dh, D), "bo": lyr["bo"],
            "ln2_g": lyr["ln2_g"], "ln2_b": lyr["ln2_b"],
            "w1": lyr["w1"].astype(jnp.bfloat16), "b1": lyr["b1"],
            "w2": lyr["w2"].astype(jnp.bfloat16), "b2": lyr["b2"],
        })
    return prepped


def clip_text_wrapper_forward(params, input_ids, attention_mask, cfg):
    B, S = input_ids.shape
    D, H = cfg["hidden"], cfg["heads"]
    Dh = D // H
    M = B * S

    # embeddings (gather glue in plain JAX); residual stream carried in bf16
    x = params["tok_emb"][input_ids] + params["pos_emb"][:S][None, :, :]
    x = x.astype(jnp.bfloat16)                                             # [B,S,D]
    mask3 = attention_mask.astype(jnp.int32).reshape(B, 1, S)

    for lyr in params["layers"]:
        # --- attention block: LN -> QKV, then attention + out-proj + residual (2 kernels) ---
        qkv = ln_qkv(x.reshape(M, D), lyr["ln1_g"], lyr["ln1_b"],
                     lyr["wqkv"], lyr["bqkv"])                             # [M, 3D] bf16
        x = attention_block(qkv.reshape(B, S, 3 * D), mask3, x,
                            lyr["wo"], lyr["bo"], H, Dh)                   # [B, S, D] bf16
        # --- MLP block: LN -> w1 -> QuickGELU -> w2 -> residual, fully fused (1 kernel) ---
        x = ln_mlp_residual(x.reshape(M, D), lyr["ln2_g"], lyr["ln2_b"],
                            lyr["w1"], lyr["b1"], lyr["w2"], lyr["b2"]).reshape(B, S, D)

    # HF CLIP pooling: pooled = final_layer_norm(hidden)[arange(B), input_ids.argmax(-1)]
    # LayerNorm is row-wise, so pooling first and applying the final LN only to the pooled
    # rows is exact (and lets LN + text_projection + L2-normalize fuse into one kernel).
    # TODO(synk): argmax-based EOS pooling assumes the EOS token has the largest vocab id
    # (old-HF CLIP behavior); newer checkpoints should look up eos_token_id explicitly.
    eos_idx = jnp.argmax(input_ids, axis=-1)
    pooled = x[jnp.arange(B), eos_idx]                                     # [B, D] bf16

    return ln_project_normalize(pooled, params["lnf_g"], params["lnf_b"], params["proj_w"])


# ----------------------------- main -----------------------------

if __name__ == "__main__":
    key = jax.random.PRNGKey(0)
    pkey, ikey = jax.random.split(key)

    params = prepare_params(init_params(pkey, CFG), CFG)

    B, S = 2, 8
    input_ids = jax.random.randint(ikey, (B, S), 1, CFG["vocab"], dtype=jnp.int32)
    lengths = jnp.array([8, 6], dtype=jnp.int32)
    attention_mask = (jnp.arange(S)[None, :] < lengths[:, None]).astype(jnp.int32)

    fwd = jax.jit(functools.partial(clip_text_wrapper_forward, cfg=CFG))
    out = fwd(params, input_ids, attention_mask)
    out = jax.block_until_ready(out)

    assert out.shape == (B, CFG["proj"])
    # L2 norms should all be (near) 1.0 after the fused normalize
    norms = jnp.linalg.norm(out, axis=-1)
    assert bool(jnp.all(jnp.abs(norms - 1.0) < 1e-3))
    print("KERNEL_OK")
</pallas_src>

<mosaic_0001>
module attributes {stable_mosaic.version = 11 : i64} {
  func.func @_k(%arg0: i32, %arg1: memref<8x128xf32, #tpu.memory_space<vmem>>, %arg2: memref<8x128xf32, #tpu.memory_space<vmem>>) attributes {dimension_semantics = [#tpu.dimension_semantics<arbitrary>], iteration_bounds = array<i64: 2>, scalar_prefetch = 0 : i64, scratch_operands = 0 : i64, tpu.core_type = #tpu.core_type<tc>, window_params = [{pipeline_mode = #tpu.pipeline_mode<synchronous>, transform_indices = @transform_0, window_bounds = array<i64: 8, 128>}, {pipeline_mode = #tpu.pipeline_mode<synchronous>, transform_indices = @transform_1, window_bounds = array<i64: 8, 128>}]} {
    %c0 = arith.constant 0 : index
    %c0_0 = arith.constant 0 : index
    %0 = vector.load %arg1[%c0, %c0_0] : memref<8x128xf32, #tpu.memory_space<vmem>>, vector<8x128xf32>
    %cst = arith.constant 1.000000e+00 : f32
    %1 = vector.broadcast %cst : f32 to vector<8x128xf32>
    %2 = arith.addf %0, %1 : vector<8x128xf32>
    %c0_1 = arith.constant 0 : index
    %c0_2 = arith.constant 0 : index
    %3 = vector.load %arg2[%c0_1, %c0_2] : memref<8x128xf32, #tpu.memory_space<vmem>>, vector<8x128xf32>
    tpu.vector_store %arg2[%c0_1, %c0_2], %2 {strides = array<i32>} : memref<8x128xf32, #tpu.memory_space<vmem>>, vector<8x128xf32>,
    return
  }
  func.func @transform_0(%arg0: i32) -> (i32, i32) {
    %c0_i32 = arith.constant 0 : i32
    %c0_i32_0 = arith.constant 0 : i32
    %c0_i32_1 = arith.constant 0 : i32
    return %c0_i32, %c0_i32_0 : i32, i32
  }
  func.func @transform_1(%arg0: i32) -> (i32, i32) {
    %c0_i32 = arith.constant 0 : i32
    %c0_i32_0 = arith.constant 0 : i32
    %c0_i32_1 = arith.constant 0 : i32
    return %c0_i32, %c0_i32_0 : i32, i32
  }
}

module attributes {stable_mosaic.version = 11 : i64} {
  func.func @_ln_mlp_kernel(%arg0: i32, %arg1: memref<8x32xbf16, #tpu.memory_space<vmem>>, %arg2: memref<1x32xf32, #tpu.memory_space<vmem>>, %arg3: memref<1x32xf32, #tpu.memory_space<vmem>>, %arg4: memref<32x64xbf16, #tpu.memory_space<vmem>>, %arg5: memref<1x64xf32, #tpu.memory_space<vmem>>, %arg6: memref<64x32xbf16, #tpu.memory_space<vmem>>, %arg7: memref<1x32xf32, #tpu.memory_space<vmem>>, %arg8: memref<8x32xbf16, #tpu.memory_space<vmem>>) attributes {dimension_semantics = [#tpu.dimension_semantics<parallel>], iteration_bounds = array<i64: 2>, scalar_prefetch = 0 : i64, scratch_operands = 0 : i64, tpu.core_type = #tpu.core_type<tc>, window_params = [{transform_indices = @transform_0, window_bounds = array<i64: 8, 32>}, {pipeline_mode = #tpu.pipeline_mode<synchronous>, transform_indices = @transform_1, window_bounds = array<i64: 1, 32>}, {pipeline_mode = #tpu.pipeline_mode<synchronous>, transform_indices = @transform_2, window_bounds = array<i64: 1, 32>}, {pipeline_mode = #tpu.pipeline_mode<synchronous>, transform_indices = @transform_3, window_bounds = array<i64: 32, 64>}, {pipeline_mode = #tpu.pipeline_mode<synchronous>, transform_indices = @transform_4, window_bounds = array<i64: 1, 64>}, {pipeline_mode = #tpu.pipeline_mode<synchronous>, transform_indices = @transform_5, window_bounds = array<i64: 64, 32>}, {pipeline_mode = #tpu.pipeline_mode<synchronous>, transform_indices = @transform_6, window_bounds = array<i64: 1, 32>}, {transform_indices = @transform_7, window_bounds = array<i64: 8, 32>}]} {
    %c0 = arith.constant 0 : index
    %c0_0 = arith.constant 0 : index
    %0 = vector.load %arg1[%c0, %c0_0] : memref<8x32xbf16, #tpu.memory_space<vmem>>, vector<8x32xbf16>
    %1 = arith.extf %0 : vector<8x32xbf16> to vector<8x32xf32>
    %cst = arith.constant dense<0.000000e+00> : vector<8xf32>
    %2 = vector.multi_reduction <add>, %1, %cst [1] : vector<8x32xf32> to vector<8xf32>
    %3 = vector.shape_cast %2 : vector<8xf32> to vector<8x1xf32>
    %cst_1 = arith.constant 3.200000e+01 : f32
    %4 = vector.broadcast %cst_1 : f32 to vector<8x1xf32>
    %5 = arith.divf %3, %4 : vector<8x1xf32>
    %6 = vector.broadcast %5 : vector<8x1xf32> to vector<8x32xf32>
    %7 = arith.subf %1, %6 : vector<8x32xf32>
    %8 = arith.mulf %7, %7 : vector<8x32xf32>
    %cst_2 = arith.constant dense<0.000000e+00> : vector<8xf32>
    %9 = vector.multi_reduction <add>, %8, %cst_2 [1] : vector<8x32xf32> to vector<8xf32>
    %10 = vector.shape_cast %9 : vector<8xf32> to vector<8x1xf32>
    %cst_3 = arith.constant 3.200000e+01 : f32
    %11 = vector.broadcast %cst_3 : f32 to vector<8x1xf32>
    %12 = arith.divf %10, %11 : vector<8x1xf32>
    %cst_4 = arith.constant 9.99999974E-6 : f32
    %13 = vector.broadcast %cst_4 : f32 to vector<8x1xf32>
    %14 = arith.addf %12, %13 : vector<8x1xf32>
    %15 = math.rsqrt %14 : vector<8x1xf32>
    %16 = vector.broadcast %15 : vector<8x1xf32> to vector<8x32xf32>
    %17 = arith.mulf %7, %16 : vector<8x32xf32>
    %c0_5 = arith.constant 0 : index
    %c0_6 = arith.constant 0 : index
    %18 = vector.load %arg2[%c0_5, %c0_6] : memref<1x32xf32, #tpu.memory_space<vmem>>, vector<1x32xf32>
    %19 = vector.broadcast %18 : vector<1x32xf32> to vector<8x32xf32>
    %20 = arith.mulf %17, %19 : vector<8x32xf32>
    %c0_7 = arith.constant 0 : index
    %c0_8 = arith.constant 0 : index
    %21 = vector.load %arg3[%c0_7, %c0_8] : memref<1x32xf32, #tpu.memory_space<vmem>>, vector<1x32xf32>
    %22 = vector.broadcast %21 : vector<1x32xf32> to vector<8x32xf32>
    %23 = arith.addf %20, %22 : vector<8x32xf32>
    %24 = arith.truncf %23 : vector<8x32xf32> to vector<8x32xbf16>
    %c0_9 = arith.constant 0 : index
    %c0_10 = arith.constant 0 : index
    %25 = vector.load %arg4[%c0_9, %c0_10] : memref<32x64xbf16, #tpu.memory_space<vmem>>, vector<32x64xbf16>
    %cst_11 = arith.constant dense<0.000000e+00> : vector<8x64xf32>
    %26 = tpu.matmul %24, %25, %cst_11 {dimension_numbers = #tpu.dot_dimension_numbers<[1], [0], [0], [1], [0, 0, 1, 1], [], []>} : vector<8x32xbf16>, vector<32x64xbf16>, vector<8x64xf32> -> vector<8x64xf32>
    %c0_12 = arith.constant 0 : index
    %c0_13 = arith.constant 0 : index
    %27 = vector.load %arg5[%c0_12, %c0_13] : memref<1x64xf32, #tpu.memory_space<vmem>>, vector<1x64xf32>
    %28 = vector.broadcast %27 : vector<1x64xf32> to vector<8x64xf32>
    %29 = arith.addf %26, %28 : vector<8x64xf32>
    %cst_14 = arith.constant -1.702000e+00 : f32
    %30 = vector.broadcast %cst_14 : f32 to vector<8x64xf32>
    %31 = arith.mulf %30, %29 : vector<8x64xf32>
    %32 = math.exp %31 : vector<8x64xf32>
    %cst_15 = arith.constant 1.000000e+00 : f32
    %33 = vector.broadcast %cst_15 : f32 to vector<8x64xf32>
    %34 = arith.addf %33, %32 : vector<8x64xf32>
    %35 = tpu.reciprocal %34 {approx = true} : vector<8x64xf32> -> vector<8x64xf32>
    %36 = arith.mulf %29, %35 : vector<8x64xf32>
    %37 = arith.truncf %36 : vector<8x64xf32> to vector<8x64xbf16>
    %c0_16 = arith.constant 0 : index
    %c0_17 = arith.constant 0 : index
    %38 = vector.load %arg6[%c0_16, %c0_17] : memref<64x32xbf16, #tpu.memory_space<vmem>>, vector<64x32xbf16>
    %cst_18 = arith.constant dense<0.000000e+00> : vector<8x32xf32>
    %39 = tpu.matmul %37, %38, %cst_18 {dimension_numbers = #tpu.dot_dimension_numbers<[1], [0], [0], [1], [0, 0, 1, 1], [], []>} : vector<8x64xbf16>, vector<64x32xbf16>, vector<8x32xf32> -> vector<8x32xf32>
    %c0_19 = arith.constant 0 : index
    %c0_20 = arith.constant 0 : index
    %40 = vector.load %arg7[%c0_19, %c0_20] : memref<1x32xf32, #tpu.memory_space<vmem>>, vector<1x32xf32>
    %41 = vector.broadcast %40 : vector<1x32xf32> to vector<8x32xf32>
    %42 = arith.addf %39, %41 : vector<8x32xf32>
    %43 = arith.addf %42, %1 : vector<8x32xf32>
    %44 = arith.truncf %43 : vector<8x32xf32> to vector<8x32xbf16>
    %c0_21 = arith.constant 0 : index
    %c0_22 = arith.constant 0 : index
    %45 = vector.load %arg8[%c0_21, %c0_22] : memref<8x32xbf16, #tpu.memory_space<vmem>>, vector<8x32xbf16>
    tpu.vector_store %arg8[%c0_21, %c0_22], %44 {strides = array<i32>} : memref<8x32xbf16, #tpu.memory_space<vmem>>, vector<8x32xbf16>,
    return
  }
  func.func @transform_0(%arg0: i32) -> (i32, i32) {
    %c0_i32 = arith.constant 0 : i32
    %c0_i32_0 = arith.constant 0 : i32
    return %arg0, %c0_i32 : i32, i32
  }
  func.func @transform_1(%arg0: i32) -> (i32, i32) {
    %c0_i32 = arith.constant 0 : i32
    %c0_i32_0 = arith.constant 0 : i32
    %c0_i32_1 = arith.constant 0 : i32
    return %c0_i32, %c0_i32_0 : i32, i32
  }
  func.func @transform_2(%arg0: i32) -> (i32, i32) {
    %c0_i32 = arith.constant 0 : i32
    %c0_i32_0 = arith.constant 0 : i32
    %c0_i32_1 = arith.constant 0 : i32
    return %c0_i32, %c0_i32_0 : i32, i32
  }
  func.func @transform_3(%arg0: i32) -> (i32, i32) {
    %c0_i32 = arith.constant 0 : i32
    %c0_i32_0 = arith.constant 0 : i32
    %c0_i32_1 = arith.constant 0 : i32
    return %c0_i32, %c0_i32_0 : i32, i32
  }
  func.func @transform_4(%arg0: i32) -> (i32, i32) {
    %c0_i32 = arith.constant 0 : i32
    %c0_i32_0 = arith.constant 0 : i32
    %c0_i32_1 = arith.constant 0 : i32
    return %c0_i32, %c0_i32_0 : i32, i32
  }
  func.func @transform_5(%arg0: i32) -> (i32, i32) {
    %c0_i32 = arith.constant 0 : i32
    %c0_i32_0 = arith.constant 0 : i32
    %c0_i32_1 = arith.constant 0 : i32
    return %c0_i32, %c0_i32_0 : i32, i32
  }
  func.func @transform_6(%arg0: i32) -> (i32, i32) {
    %c0_i32 = arith.constant 0 : i32
    %c0_i32_0 = arith.constant 0 : i32
    %c0_i32_1 = arith.constant 0 : i32
    return %c0_i32, %c0_i32_0 : i32, i32
  }
  func.func @transform_7(%arg0: i32) -> (i32, i32) {
    %c0_i32 = arith.constant 0 : i32
    %c0_i32_0 = arith.constant 0 : i32
    return %arg0, %c0_i32 : i32, i32
  }
}

module attributes {stable_mosaic.version = 11 : i64} {
  func.func @_ln_qkv_kernel(%arg0: i32, %arg1: memref<8x32xbf16, #tpu.memory_space<vmem>>, %arg2: memref<1x32xf32, #tpu.memory_space<vmem>>, %arg3: memref<1x32xf32, #tpu.memory_space<vmem>>, %arg4: memref<32x96xbf16, #tpu.memory_space<vmem>>, %arg5: memref<1x96xf32, #tpu.memory_space<vmem>>, %arg6: memref<8x96xbf16, #tpu.memory_space<vmem>>) attributes {dimension_semantics = [#tpu.dimension_semantics<parallel>], iteration_bounds = array<i64: 2>, scalar_prefetch = 0 : i64, scratch_operands = 0 : i64, tpu.core_type = #tpu.core_type<tc>, window_params = [{transform_indices = @transform_0, window_bounds = array<i64: 8, 32>}, {pipeline_mode = #tpu.pipeline_mode<synchronous>, transform_indices = @transform_1, window_bounds = array<i64: 1, 32>}, {pipeline_mode = #tpu.pipeline_mode<synchronous>, transform_indices = @transform_2, window_bounds = array<i64: 1, 32>}, {pipeline_mode = #tpu.pipeline_mode<synchronous>, transform_indices = @transform_3, window_bounds = array<i64: 32, 96>}, {pipeline_mode = #tpu.pipeline_mode<synchronous>, transform_indices = @transform_4, window_bounds = array<i64: 1, 96>}, {transform_indices = @transform_5, window_bounds = array<i64: 8, 96>}]} {
    %c0 = arith.constant 0 : index
    %c0_0 = arith.constant 0 : index
    %0 = vector.load %arg1[%c0, %c0_0] : memref<8x32xbf16, #tpu.memory_space<vmem>>, vector<8x32xbf16>
    %1 = arith.extf %0 : vector<8x32xbf16> to vector<8x32xf32>
    %cst = arith.constant dense<0.000000e+00> : vector<8xf32>
    %2 = vector.multi_reduction <add>, %1, %cst [1] : vector<8x32xf32> to vector<8xf32>
    %3 = vector.shape_cast %2 : vector<8xf32> to vector<8x1xf32>
    %cst_1 = arith.constant 3.200000e+01 : f32
    %4 = vector.broadcast %cst_1 : f32 to vector<8x1xf32>
    %5 = arith.divf %3, %4 : vector<8x1xf32>
    %6 = vector.broadcast %5 : vector<8x1xf32> to vector<8x32xf32>
    %7 = arith.subf %1, %6 : vector<8x32xf32>
    %8 = arith.mulf %7, %7 : vector<8x32xf32>
    %cst_2 = arith.constant dense<0.000000e+00> : vector<8xf32>
    %9 = vector.multi_reduction <add>, %8, %cst_2 [1] : vector<8x32xf32> to vector<8xf32>
    %10 = vector.shape_cast %9 : vector<8xf32> to vector<8x1xf32>
    %cst_3 = arith.constant 3.200000e+01 : f32
    %11 = vector.broadcast %cst_3 : f32 to vector<8x1xf32>
    %12 = arith.divf %10, %11 : vector<8x1xf32>
    %cst_4 = arith.constant 9.99999974E-6 : f32
    %13 = vector.broadcast %cst_4 : f32 to vector<8x1xf32>
    %14 = arith.addf %12, %13 : vector<8x1xf32>
    %15 = math.rsqrt %14 : vector<8x1xf32>
    %16 = vector.broadcast %15 : vector<8x1xf32> to vector<8x32xf32>
    %17 = arith.mulf %7, %16 : vector<8x32xf32>
    %c0_5 = arith.constant 0 : index
    %c0_6 = arith.constant 0 : index
    %18 = vector.load %arg2[%c0_5, %c0_6] : memref<1x32xf32, #tpu.memory_space<vmem>>, vector<1x32xf32>
    %19 = vector.broadcast %18 : vector<1x32xf32> to vector<8x32xf32>
    %20 = arith.mulf %17, %19 : vector<8x32xf32>
    %c0_7 = arith.constant 0 : index
    %c0_8 = arith.constant 0 : index
    %21 = vector.load %arg3[%c0_7, %c0_8] : memref<1x32xf32, #tpu.memory_space<vmem>>, vector<1x32xf32>
    %22 = vector.broadcast %21 : vector<1x32xf32> to vector<8x32xf32>
    %23 = arith.addf %20, %22 : vector<8x32xf32>
    %24 = arith.truncf %23 : vector<8x32xf32> to vector<8x32xbf16>
    %c0_9 = arith.constant 0 : index
    %c0_10 = arith.constant 0 : index
    %25 = vector.load %arg4[%c0_9, %c0_10] : memref<32x96xbf16, #tpu.memory_space<vmem>>, vector<32x96xbf16>
    %cst_11 = arith.constant dense<0.000000e+00> : vector<8x96xf32>
    %26 = tpu.matmul %24, %25, %cst_11 {dimension_numbers = #tpu.dot_dimension_numbers<[1], [0], [0], [1], [0, 0, 1, 1], [], []>} : vector<8x32xbf16>, vector<32x96xbf16>, vector<8x96xf32> -> vector<8x96xf32>
    %c0_12 = arith.constant 0 : index
    %c0_13 = arith.constant 0 : index
    %27 = vector.load %arg5[%c0_12, %c0_13] : memref<1x96xf32, #tpu.memory_space<vmem>>, vector<1x96xf32>
    %28 = vector.broadcast %27 : vector<1x96xf32> to vector<8x96xf32>
    %29 = arith.addf %26, %28 : vector<8x96xf32>
    %30 = arith.truncf %29 : vector<8x96xf32> to vector<8x96xbf16>
    %c0_14 = arith.constant 0 : index
    %c0_15 = arith.constant 0 : index
    %31 = vector.load %arg6[%c0_14, %c0_15] : memref<8x96xbf16, #tpu.memory_space<vmem>>, vector<8x96xbf16>
    tpu.vector_store %arg6[%c0_14, %c0_15], %30 {strides = array<i32>} : memref<8x96xbf16, #tpu.memory_space<vmem>>, vector<8x96xbf16>,
    return
  }
  func.func @transform_0(%arg0: i32) -> (i32, i32) {
    %c0_i32 = arith.constant 0 : i32
    %c0_i32_0 = arith.constant 0 : i32
    return %arg0, %c0_i32 : i32, i32
  }
  func.func @transform_1(%arg0: i32) -> (i32, i32) {
    %c0_i32 = arith.constant 0 : i32
    %c0_i32_0 = arith.constant 0 : i32
    %c0_i32_1 = arith.constant 0 : i32
    return %c0_i32, %c0_i32_0 : i32, i32
  }
  func.func @transform_2(%arg0: i32) -> (i32, i32) {
    %c0_i32 = arith.constant 0 : i32
    %c0_i32_0 = arith.constant 0 : i32
    %c0_i32_1 = arith.constant 0 : i32
    return %c0_i32, %c0_i32_0 : i32, i32
  }
  func.func @transform_3(%arg0: i32) -> (i32, i32) {
    %c0_i32 = arith.constant 0 : i32
    %c0_i32_0 = arith.constant 0 : i32
    %c0_i32_1 = arith.constant 0 : i32
    return %c0_i32, %c0_i32_0 : i32, i32
  }
  func.func @transform_4(%arg0: i32) -> (i32, i32) {
    %c0_i32 = arith.constant 0 : i32
    %c0_i32_0 = arith.constant 0 : i32
    %c0_i32_1 = arith.constant 0 : i32
    return %c0_i32, %c0_i32_0 : i32, i32
  }
  func.func @transform_5(%arg0: i32) -> (i32, i32) {
    %c0_i32 = arith.constant 0 : i32
    %c0_i32_0 = arith.constant 0 : i32
    return %arg0, %c0_i32 : i32, i32
  }
}

module attributes {stable_mosaic.version = 11 : i64} {
  func.func @_attn_kernel(%arg0: i32, %arg1: memref<1x8x96xbf16, #tpu.memory_space<vmem>>, %arg2: memref<1x1x8xi32, #tpu.memory_space<vmem>>, %arg3: memref<1x8x32xbf16, #tpu.memory_space<vmem>>, %arg4: memref<4x8x32xbf16, #tpu.memory_space<vmem>>, %arg5: memref<1x32xf32, #tpu.memory_space<vmem>>, %arg6: memref<1x8x32xbf16, #tpu.memory_space<vmem>>) attributes {dimension_semantics = [#tpu.dimension_semantics<parallel>], iteration_bounds = array<i64: 2>, scalar_prefetch = 0 : i64, scratch_operands = 0 : i64, tpu.core_type = #tpu.core_type<tc>, window_params = [{transform_indices = @transform_0, window_bounds = array<i64: 1, 8, 96>}, {transform_indices = @transform_1, window_bounds = array<i64: 1, 1, 8>}, {transform_indices = @transform_2, window_bounds = array<i64: 1, 8, 32>}, {pipeline_mode = #tpu.pipeline_mode<synchronous>, transform_indices = @transform_3, window_bounds = array<i64: 4, 8, 32>}, {pipeline_mode = #tpu.pipeline_mode<synchronous>, transform_indices = @transform_4, window_bounds = array<i64: 1, 32>}, {transform_indices = @transform_5, window_bounds = array<i64: 1, 8, 32>}]} {
    %c0 = arith.constant 0 : index
    %c0_0 = arith.constant 0 : index
    %c0_1 = arith.constant 0 : index
    %0 = vector.load %arg1[%c0, %c0_0, %c0_1] : memref<1x8x96xbf16, #tpu.memory_space<vmem>>, vector<1x8x96xbf16>
    %1 = vector.shape_cast %0 : vector<1x8x96xbf16> to vector<8x96xbf16>
    %2 = tpu.iota {dimensions = array<i32: 0>} : vector<8x8xi32>
    %3 = tpu.iota {dimensions = array<i32: 1>} : vector<8x8xi32>
    %4 = arith.cmpi sle, %3, %2 : vector<8x8xi32>
    %c0_2 = arith.constant 0 : index
    %c0_3 = arith.constant 0 : index
    %c0_4 = arith.constant 0 : index
    %5 = vector.load %arg2[%c0_2, %c0_3, %c0_4] : memref<1x1x8xi32, #tpu.memory_space<vmem>>, vector<1x1x8xi32>
    %6 = vector.shape_cast %5 : vector<1x1x8xi32> to vector<1x8xi32>
    %c0_i32 = arith.constant 0 : i32
    %7 = vector.broadcast %c0_i32 : i32 to vector<1x8xi32>
    %8 = arith.cmpi sgt, %6, %7 : vector<1x8xi32>
    %9 = vector.broadcast %8 : vector<1x8xi1> to vector<8x8xi1>
    %10 = arith.andi %4, %9 : vector<8x8xi1>
    %cst = arith.constant 0.000000e+00 : f32
    %cst_5 = arith.constant -1.000000e+09 : f32
    %11 = vector.broadcast %cst : f32 to vector<8x8xf32>
    %12 = vector.broadcast %cst_5 : f32 to vector<8x8xf32>
    %13 = arith.select %10, %11, %12 : vector<8x8xi1>, vector<8x8xf32>
    %14 = vector.extract_strided_slice %1 {offsets = [0, 0], sizes = [8, 8], strides = [1, 1]} : vector<8x96xbf16> to vector<8x8xbf16>
    %15 = vector.extract_strided_slice %1 {offsets = [0, 8], sizes = [8, 8], strides = [1, 1]} : vector<8x96xbf16> to vector<8x8xbf16>
    %16 = vector.extract_strided_slice %1 {offsets = [0, 16], sizes = [8, 8], strides = [1, 1]} : vector<8x96xbf16> to vector<8x8xbf16>
    %17 = vector.extract_strided_slice %1 {offsets = [0, 24], sizes = [8, 8], strides = [1, 1]} : vector<8x96xbf16> to vector<8x8xbf16>
    %18 = vector.shape_cast %14 : vector<8x8xbf16> to vector<1x8x8xbf16>
    %19 = vector.shape_cast %15 : vector<8x8xbf16> to vector<1x8x8xbf16>
    %20 = vector.shape_cast %16 : vector<8x8xbf16> to vector<1x8x8xbf16>
    %21 = vector.shape_cast %17 : vector<8x8xbf16> to vector<1x8x8xbf16>
    %22 = tpu.concatenate %18, %19, %20, %21 in 0 : vector<1x8x8xbf16>, vector<1x8x8xbf16>, vector<1x8x8xbf16>, vector<1x8x8xbf16> -> vector<4x8x8xbf16>
    %23 = vector.extract_strided_slice %1 {offsets = [0, 32], sizes = [8, 8], strides = [1, 1]} : vector<8x96xbf16> to vector<8x8xbf16>
    %24 = vector.extract_strided_slice %1 {offsets = [0, 40], sizes = [8, 8], strides = [1, 1]} : vector<8x96xbf16> to vector<8x8xbf16>
    %25 = vector.extract_strided_slice %1 {offsets = [0, 48], sizes = [8, 8], strides = [1, 1]} : vector<8x96xbf16> to vector<8x8xbf16>
    %26 = vector.extract_strided_slice %1 {offsets = [0, 56], sizes = [8, 8], strides = [1, 1]} : vector<8x96xbf16> to vector<8x8xbf16>
    %27 = vector.shape_cast %23 : vector<8x8xbf16> to vector<1x8x8xbf16>
    %28 = vector.shape_cast %24 : vector<8x8xbf16> to vector<1x8x8xbf16>
    %29 = vector.shape_cast %25 : vector<8x8xbf16> to vector<1x8x8xbf16>
    %30 = vector.shape_cast %26 : vector<8x8xbf16> to vector<1x8x8xbf16>
    %31 = tpu.concatenate %27, %28, %29, %30 in 0 : vector<1x8x8xbf16>, vector<1x8x8xbf16>, vector<1x8x8xbf16>, vector<1x8x8xbf16> -> vector<4x8x8xbf16>
    %32 = vector.extract_strided_slice %1 {offsets = [0, 64], sizes = [8, 8], strides = [1, 1]} : vector<8x96xbf16> to vector<8x8xbf16>
    %33 = vector.extract_strided_slice %1 {offsets = [0, 72], sizes = [8, 8], strides = [1, 1]} : vector<8x96xbf16> to vector<8x8xbf16>
    %34 = vector.extract_strided_slice %1 {offsets = [0, 80], sizes = [8, 8], strides = [1, 1]} : vector<8x96xbf16> to vector<8x8xbf16>
    %35 = vector.extract_strided_slice %1 {offsets = [0, 88], sizes = [8, 8], strides = [1, 1]} : vector<8x96xbf16> to vector<8x8xbf16>
    %36 = vector.shape_cast %32 : vector<8x8xbf16> to vector<1x8x8xbf16>
    %37 = vector.shape_cast %33 : vector<8x8xbf16> to vector<1x8x8xbf16>
    %38 = vector.shape_cast %34 : vector<8x8xbf16> to vector<1x8x8xbf16>
    %39 = vector.shape_cast %35 : vector<8x8xbf16> to vector<1x8x8xbf16>
    %40 = tpu.concatenate %36, %37, %38, %39 in 0 : vector<1x8x8xbf16>, vector<1x8x8xbf16>, vector<1x8x8xbf16>, vector<1x8x8xbf16> -> vector<4x8x8xbf16>
    "tpu.trace_start"() <{level = 10 : i32, message = "hqd,hkd->hqk"}> : () -> ()
    %cst_6 = arith.constant dense<0.000000e+00> : vector<4x8x8xf32>
    %41 = tpu.matmul %22, %31, %cst_6 {dimension_numbers = #tpu.dot_dimension_numbers<[2], [2], [1], [1], [0, 0, 0, 1, 1, 1], [0], [0]>} : vector<4x8x8xbf16>, vector<4x8x8xbf16>, vector<4x8x8xf32> -> vector<4x8x8xf32>
    "tpu.trace_stop"() : () -> ()
    %42 = vector.shape_cast %13 : vector<8x8xf32> to vector<1x8x8xf32>
    %43 = vector.broadcast %42 : vector<1x8x8xf32> to vector<4x8x8xf32>
    %44 = arith.addf %41, %43 : vector<4x8x8xf32>
    %cst_7 = arith.constant dense<0xFF800000> : vector<4x8xf32>
    %45 = vector.multi_reduction <maximumf>, %44, %cst_7 [2] : vector<4x8x8xf32> to vector<4x8xf32>
    %46 = vector.shape_cast %45 : vector<4x8xf32> to vector<4x8x1xf32>
    %47 = vector.broadcast %46 : vector<4x8x1xf32> to vector<4x8x8xf32>
    %48 = arith.subf %44, %47 : vector<4x8x8xf32>
    %49 = math.exp %48 : vector<4x8x8xf32>
    %cst_8 = arith.constant dense<0.000000e+00> : vector<4x8xf32>
    %50 = vector.multi_reduction <add>, %49, %cst_8 [2] : vector<4x8x8xf32> to vector<4x8xf32>
    %51 = vector.shape_cast %50 : vector<4x8xf32> to vector<4x8x1xf32>
    %52 = tpu.reciprocal %51 {approx = true} : vector<4x8x1xf32> -> vector<4x8x1xf32>
    %53 = vector.broadcast %52 : vector<4x8x1xf32> to vector<4x8x8xf32>
    %54 = arith.mulf %49, %53 : vector<4x8x8xf32>
    %55 = arith.truncf %54 : vector<4x8x8xf32> to vector<4x8x8xbf16>
    "tpu.trace_start"() <{level = 10 : i32, message = "hqk,hkd->hqd"}> : () -> ()
    %cst_9 = arith.constant dense<0.000000e+00> : vector<4x8x8xf32>
    %56 = tpu.matmul %55, %40, %cst_9 {dimension_numbers = #tpu.dot_dimension_numbers<[2], [1], [1], [2], [0, 0, 0, 1, 1, 2], [0], [0]>} : vector<4x8x8xbf16>, vector<4x8x8xbf16>, vector<4x8x8xf32> -> vector<4x8x8xf32>
    "tpu.trace_stop"() : () -> ()
    %57 = arith.truncf %56 : vector<4x8x8xf32> to vector<4x8x8xbf16>
    %c0_10 = arith.constant 0 : index
    %c0_11 = arith.constant 0 : index
    %c0_12 = arith.constant 0 : index
    %58 = vector.load %arg4[%c0_10, %c0_11, %c0_12] : memref<4x8x32xbf16, #tpu.memory_space<vmem>>, vector<4x8x32xbf16>
    "tpu.trace_start"() <{level = 10 : i32, message = "hqd,hdn->hqn"}> : () -> ()
    %cst_13 = arith.constant dense<0.000000e+00> : vector<4x8x32xf32>
    %59 = tpu.matmul %57, %58, %cst_13 {dimension_numbers = #tpu.dot_dimension_numbers<[2], [1], [1], [2], [0, 0, 0, 1, 1, 2], [0], [0]>} : vector<4x8x8xbf16>, vector<4x8x32xbf16>, vector<4x8x32xf32> -> vector<4x8x32xf32>
    "tpu.trace_stop"() : () -> ()
    %cst_14 = arith.constant dense<0.000000e+00> : vector<8x32xf32>
    %60 = vector.multi_reduction <add>, %59, %cst_14 [0] : vector<4x8x32xf32> to vector<8x32xf32>
    %c0_15 = arith.constant 0 : index
    %c0_16 = arith.constant 0 : index
    %61 = vector.load %arg5[%c0_15, %c0_16] : memref<1x32xf32, #tpu.memory_space<vmem>>, vector<1x32xf32>
    %62 = vector.broadcast %61 : vector<1x32xf32> to vector<8x32xf32>
    %63 = arith.addf %60, %62 : vector<8x32xf32>
    %c0_17 = arith.constant 0 : index
    %c0_18 = arith.constant 0 : index
    %c0_19 = arith.constant 0 : index
    %64 = vector.load %arg3[%c0_17, %c0_18, %c0_19] : memref<1x8x32xbf16, #tpu.memory_space<vmem>>, vector<1x8x32xbf16>
    %65 = vector.shape_cast %64 : vector<1x8x32xbf16> to vector<8x32xbf16>
    %66 = arith.extf %65 : vector<8x32xbf16> to vector<8x32xf32>
    %67 = arith.addf %63, %66 : vector<8x32xf32>
    %68 = arith.truncf %67 : vector<8x32xf32> to vector<8x32xbf16>
    %c0_20 = arith.constant 0 : index
    %c0_21 = arith.constant 0 : index
    %c0_22 = arith.constant 0 : index
    %69 = vector.load %arg6[%c0_20, %c0_21, %c0_22] : memref<1x8x32xbf16, #tpu.memory_space<vmem>>, vector<1x8x32xbf16>
    %70 = vector.shape_cast %69 : vector<1x8x32xbf16> to vector<8x32xbf16>
    %71 = vector.shape_cast %68 : vector<8x32xbf16> to vector<1x8x32xbf16>
    tpu.vector_store %arg6[%c0_20, %c0_21, %c0_22], %71 {strides = array<i32>} : memref<1x8x32xbf16, #tpu.memory_space<vmem>>, vector<1x8x32xbf16>,
    return
  }
  func.func @transform_0(%arg0: i32) -> (i32, i32, i32) {
    %c0_i32 = arith.constant 0 : i32
    %c0_i32_0 = arith.constant 0 : i32
    %c0_i32_1 = arith.constant 0 : i32
    return %arg0, %c0_i32, %c0_i32_0 : i32, i32, i32
  }
  func.func @transform_1(%arg0: i32) -> (i32, i32, i32) {
    %c0_i32 = arith.constant 0 : i32
    %c0_i32_0 = arith.constant 0 : i32
    %c0_i32_1 = arith.constant 0 : i32
    return %arg0, %c0_i32, %c0_i32_0 : i32, i32, i32
  }
  func.func @transform_2(%arg0: i32) -> (i32, i32, i32) {
    %c0_i32 = arith.constant 0 : i32
    %c0_i32_0 = arith.constant 0 : i32
    %c0_i32_1 = arith.constant 0 : i32
    return %arg0, %c0_i32, %c0_i32_0 : i32, i32, i32
  }
  func.func @transform_3(%arg0: i32) -> (i32, i32, i32) {
    %c0_i32 = arith.constant 0 : i32
    %c0_i32_0 = arith.constant 0 : i32
    %c0_i32_1 = arith.constant 0 : i32
    %c0_i32_2 = arith.constant 0 : i32
    return %c0_i32, %c0_i32_0, %c0_i32_1 : i32, i32, i32
  }
  func.func @transform_4(%arg0: i32) -> (i32, i32) {
    %c0_i32 = arith.constant 0 : i32
    %c0_i32_0 = arith.constant 0 : i32
    %c0_i32_1 = arith.constant 0 : i32
    return %c0_i32, %c0_i32_0 : i32, i32
  }
  func.func @transform_5(%arg0: i32) -> (i32, i32, i32) {
    %c0_i32 = arith.constant 0 : i32
    %c0_i32_0 = arith.constant 0 : i32
    %c0_i32_1 = arith.constant 0 : i32
    return %arg0, %c0_i32, %c0_i32_0 : i32, i32, i32
  }
}

module attributes {stable_mosaic.version = 11 : i64} {
  func.func @_ln_proj_norm_kernel(%arg0: memref<2x32xbf16, #tpu.memory_space<vmem>>, %arg1: memref<1x32xf32, #tpu.memory_space<vmem>>, %arg2: memref<1x32xf32, #tpu.memory_space<vmem>>, %arg3: memref<32x16xbf16, #tpu.memory_space<vmem>>, %arg4: memref<2x16xf32, #tpu.memory_space<vmem>>) attributes {dimension_semantics = [], scalar_prefetch = 0 : i64, scratch_operands = 0 : i64, tpu.core_type = #tpu.core_type<tc>} {
    %c0 = arith.constant 0 : index
    %c0_0 = arith.constant 0 : index
    %0 = vector.load %arg0[%c0, %c0_0] : memref<2x32xbf16, #tpu.memory_space<vmem>>, vector<2x32xbf16>
    %1 = arith.extf %0 : vector<2x32xbf16> to vector<2x32xf32>
    %cst = arith.constant dense<0.000000e+00> : vector<2xf32>
    %2 = vector.multi_reduction <add>, %1, %cst [1] : vector<2x32xf32> to vector<2xf32>
    %3 = vector.shape_cast %2 : vector<2xf32> to vector<2x1xf32>
    %cst_1 = arith.constant 3.200000e+01 : f32
    %4 = vector.broadcast %cst_1 : f32 to vector<2x1xf32>
    %5 = arith.divf %3, %4 : vector<2x1xf32>
    %6 = vector.broadcast %5 : vector<2x1xf32> to vector<2x32xf32>
    %7 = arith.subf %1, %6 : vector<2x32xf32>
    %8 = arith.mulf %7, %7 : vector<2x32xf32>
    %cst_2 = arith.constant dense<0.000000e+00> : vector<2xf32>
    %9 = vector.multi_reduction <add>, %8, %cst_2 [1] : vector<2x32xf32> to vector<2xf32>
    %10 = vector.shape_cast %9 : vector<2xf32> to vector<2x1xf32>
    %cst_3 = arith.constant 3.200000e+01 : f32
    %11 = vector.broadcast %cst_3 : f32 to vector<2x1xf32>
    %12 = arith.divf %10, %11 : vector<2x1xf32>
    %cst_4 = arith.constant 9.99999974E-6 : f32
    %13 = vector.broadcast %cst_4 : f32 to vector<2x1xf32>
    %14 = arith.addf %12, %13 : vector<2x1xf32>
    %15 = math.rsqrt %14 : vector<2x1xf32>
    %16 = vector.broadcast %15 : vector<2x1xf32> to vector<2x32xf32>
    %17 = arith.mulf %7, %16 : vector<2x32xf32>
    %c0_5 = arith.constant 0 : index
    %c0_6 = arith.constant 0 : index
    %18 = vector.load %arg1[%c0_5, %c0_6] : memref<1x32xf32, #tpu.memory_space<vmem>>, vector<1x32xf32>
    %19 = vector.broadcast %18 : vector<1x32xf32> to vector<2x32xf32>
    %20 = arith.mulf %17, %19 : vector<2x32xf32>
    %c0_7 = arith.constant 0 : index
    %c0_8 = arith.constant 0 : index
    %21 = vector.load %arg2[%c0_7, %c0_8] : memref<1x32xf32, #tpu.memory_space<vmem>>, vector<1x32xf32>
    %22 = vector.broadcast %21 : vector<1x32xf32> to vector<2x32xf32>
    %23 = arith.addf %20, %22 : vector<2x32xf32>
    %24 = arith.truncf %23 : vector<2x32xf32> to vector<2x32xbf16>
    %c0_9 = arith.constant 0 : index
    %c0_10 = arith.constant 0 : index
    %25 = vector.load %arg3[%c0_9, %c0_10] : memref<32x16xbf16, #tpu.memory_space<vmem>>, vector<32x16xbf16>
    %cst_11 = arith.constant dense<0.000000e+00> : vector<2x16xf32>
    %26 = tpu.matmul %24, %25, %cst_11 {dimension_numbers = #tpu.dot_dimension_numbers<[1], [0], [0], [1], [0, 0, 1, 1], [], []>} : vector<2x32xbf16>, vector<32x16xbf16>, vector<2x16xf32> -> vector<2x16xf32>
    %27 = arith.mulf %26, %26 : vector<2x16xf32>
    %cst_12 = arith.constant dense<0.000000e+00> : vector<2xf32>
    %28 = vector.multi_reduction <add>, %27, %cst_12 [1] : vector<2x16xf32> to vector<2xf32>
    %29 = vector.shape_cast %28 : vector<2xf32> to vector<2x1xf32>
    %30 = math.sqrt %29 : vector<2x1xf32>
    %cst_13 = arith.constant 9.99999996E-13 : f32
    %31 = vector.broadcast %cst_13 : f32 to vector<2x1xf32>
    %32 = arith.maximumf %30, %31 : vector<2x1xf32>
    %33 = vector.broadcast %32 : vector<2x1xf32> to vector<2x16xf32>
    %34 = arith.divf %26, %33 : vector<2x16xf32>
    %c0_14 = arith.constant 0 : index
    %c0_15 = arith.constant 0 : index
    %35 = vector.load %arg4[%c0_14, %c0_15] : memref<2x16xf32, #tpu.memory_space<vmem>>, vector<2x16xf32>
    tpu.vector_store %arg4[%c0_14, %c0_15], %34 {strides = array<i32>} : memref<2x16xf32, #tpu.memory_space<vmem>>, vector<2x16xf32>,
    return
  }
}

</mosaic_0001>

<llo_original>
// kernel: tpu_custom_call.1
$region0: #{tpu_custom_call.1}
  #allocation0 [shape = 'u32[]', space=smem, size = 0x4, offset = 0x4, fixed_abs, tag = 'smem constant byte address 0x4 - core index']
  #allocation1 [shape = 'u32[144,128]{1,0:T(1,128)}', space=vmem, size = 0x12000, scoped, tag = 'internal scratch']
  %s0 = inlined_call_operand.hbm [shape: f32[8,128], index: 0, kind: input, shape index: {}]
  %s1 = inlined_call_operand.hbm [shape: f32[8,128], index: 1, kind: output, shape index: {}]
  %s2 = sld [smem:[#allocation0]]
  $region41: #{tpu_custom_call.1} parent=0
    _
  %s4 = ssub.s32 1, %s2
  %s5 = scalar_select 0, %s4, %s2
  $region1: #{tpu_custom_call.1} parent=0
    #allocation2 [shape = 'u8[4096]{0}', space=vmem, size = 0x1000, scoped, tag = 'input window, operand 0, single buffered']
    #allocation3 [shape = 's32[2]{0}', space=sflag, size = 0x8, scoped, tag = 'scoped memory for tpu_custom_call.1']
    #allocation4 [shape = 's32[2]{0}', space=sflag, size = 0x8, scoped, tag = 'scoped memory for tpu_custom_call.1']
    #allocation5 [shape = 'u8[4096]{0}', space=vmem, size = 0x1000, scoped, tag = 'output window, operand 0, single buffered']
    %6 = vsyncpa [#allocation3], 0
    %7 = vsyncpa [#allocation4], 0
    loop: start=0, step=1, limit=4
    $region2: #{tpu_custom_call.1} parent=1 // loop_pre_header
      _
    $region3: #{tpu_custom_call.1} parent=1 // loop_header
      %s9 = sphi 0, %s13
      %p10 = scmp.ge.s32.totalorder %s9, 4
      %s17 = sphi 0, %s17
      %s19 = sphi 0, %s17
      %s20 = sphi 0, %s19
      %s34 = sphi 0, %s20
      %s38 = sphi 0, %s38
      %s40 = sphi 0, %s38
      %s41 = sphi 0, %s40
      %s55 = sphi 0, %s41
    $region4: #{tpu_custom_call.1} parent=1 // loop_header_branch
      %12 = sbr.rel (%p10) target = $region8
    $region5: #{tpu_custom_call.1} parent=1 // loop_body
      %s14 = ssub.s32 %s9, 1
      %s15 = ssub.s32 %s9, 2
      %s16 = sadd.s32 %s9, 1
      %s18 = sadd.s32 %s17, 1
      %p21 = scmp.eq.s32.totalorder %s9, 1
      %p22 = scmp.ne.s32.totalorder %s17, %s19
      %p23 = scmp.eq.s32.totalorder %s9, 0
      %p24 = por %p22, %p23
      %p25 = scmp.ne.s32.totalorder %s17, %s19
      %p26 = scmp.eq.s32.totalorder %s14, 1
      %p27 = por %p25, %p26
      %p28 = scmp.ne.s32.totalorder %s19, %s20
      %p29 = scmp.eq.s32.totalorder %s14, 0
      %p30 = por %p28, %p29
      %p31 = scmp.ne.s32.totalorder %s19, %s20
      %p32 = scmp.eq.s32.totalorder %s15, 1
      %p33 = por %p31, %p32
      %p35 = scmp.ne.s32.totalorder %s20, %s34
      %p36 = scmp.eq.s32.totalorder %s15, 0
      %p37 = por %p35, %p36
      %s39 = sadd.s32 %s38, 1
      %p42 = scmp.eq.s32.totalorder %s9, 1
      %p43 = scmp.ne.s32.totalorder %s38, %s40
      %p44 = scmp.eq.s32.totalorder %s9, 0
      %p45 = por %p43, %p44
      %p46 = scmp.ne.s32.totalorder %s38, %s40
      %p47 = scmp.eq.s32.totalorder %s14, 1
      %p48 = por %p46, %p47
      %p49 = scmp.ne.s32.totalorder %s40, %s41
      %p50 = scmp.eq.s32.totalorder %s14, 0
      %p51 = por %p49, %p50
      %p52 = scmp.ne.s32.totalorder %s40, %s41
      %p53 = scmp.eq.s32.totalorder %s15, 1
      %p54 = por %p52, %p53
      %p56 = scmp.ne.s32.totalorder %s41, %s55
      %p57 = scmp.eq.s32.totalorder %s15, 0
      %p58 = por %p56, %p57
      %p59 = scmp.le.s32.totalorder 1, %s9
      %p60 = scmp.lt.s32.totalorder %s9, 3
      %p61 = pnand %p59, %p60
      %p62 = pneg %p61
      // Predicated region
      $region9: #{tpu_custom_call.1} parent=5 // pred_check
        _
      $region10: #{tpu_custom_call.1} parent=5 // pred_check_branch
        %64 = sbr.rel (%p61) target = $region12
      $region11: #{tpu_custom_call.1} parent=5 // pred_region
        %s65 = ssub.s32 %s9, 1
        // Predicated region
        $region13: #{tpu_custom_call.1} parent=11 // pred_check
          %p66 = pneg %p30
        $region14: #{tpu_custom_call.1} parent=11 // pred_check_branch
          %68 = sbr.rel (%p66) target = $region16
        $region15: #{tpu_custom_call.1} parent=11 // pred_region
          %s70 = ssub.s32 128, 128
          %71 = vsyncadd [#allocation3], %s70
          %s73 = sshll.u32 [#allocation2], 4
          %s74 = int_to_ptr.vmem [resolvable:$true] %s73
          %76 = dma.hbm_to_vmem [thread:$0]  %s0, 128, %s74, [#allocation3]
        $region16: #{tpu_custom_call.1} parent=11 // pred_fallthru
          _
      $region12: #{tpu_custom_call.1} parent=5 // pred_fallthru
        _
      %p77 = scmp.lt.s32.totalorder %s9, 2
      // Predicated region
      $region17: #{tpu_custom_call.1} parent=5 // pred_check
        %p78 = pneg %p77
      $region18: #{tpu_custom_call.1} parent=5 // pred_check_branch
        %80 = sbr.rel (%p78) target = $region20
      $region19: #{tpu_custom_call.1} parent=5 // pred_region
        _
      $region20: #{tpu_custom_call.1} parent=5 // pred_fallthru
        _
      %p81 = scmp.le.s32.totalorder 1, %s9
      %p82 = scmp.lt.s32.totalorder %s9, 3
      %p83 = pnand %p81, %p82
      %p84 = pneg %p83
      // Predicated region
      $region21: #{tpu_custom_call.1} parent=5 // pred_check
        _
      $region22: #{tpu_custom_call.1} parent=5 // pred_check_branch
        %86 = sbr.rel (%p83) target = $region24
      $region23: #{tpu_custom_call.1} parent=5 // pred_region
        %s87 = ssub.s32 %s9, 1
        // Predicated region
        $region25: #{tpu_custom_call.1} parent=23 // pred_check
          %p88 = pneg %p30
        $region26: #{tpu_custom_call.1} parent=23 // pred_check_branch
          %90 = sbr.rel (%p88) target = $region28
        $region27: #{tpu_custom_call.1} parent=23 // pred_region
          %91 = dma.done [#allocation3], 128
        $region28: #{tpu_custom_call.1} parent=23 // pred_fallthru
          _
        %p92 = pneg %p30
        %p93 = pneg %p27
        %p94 = pneg %p51
        %p95 = pneg %p48
        %v96 = vld [vmem:[#allocation2] sm:$0xff]
        %v97 = vadd.f32 %v96, 1.0
        %98 = vst [vmem:[#allocation5] sm:$0xff] %v97
        // Predicated region
        $region29: #{tpu_custom_call.1} parent=23 // pred_check
          %p99 = pneg %p48
        $region30: #{tpu_custom_call.1} parent=23 // pred_check_branch
          %101 = sbr.rel (%p99) target = $region32
        $region31: #{tpu_custom_call.1} parent=23 // pred_region
          %s103 = ssub.s32 128, 128
          %104 = vsyncadd [#allocation4], %s103
          %s106 = sshll.u32 [#allocation5], 4
          %s107 = int_to_ptr.vmem [resolvable:$true] %s106
          %109 = dma.vmem_to_hbm [thread:$0]  %s107, 128, %s1, [#allocation4]
        $region32: #{tpu_custom_call.1} parent=23 // pred_fallthru
          _
        // Predicated region
        $region33: #{tpu_custom_call.1} parent=23 // pred_check
          %p110 = pneg %p48
        $region34: #{tpu_custom_call.1} parent=23 // pred_check_branch
          %112 = sbr.rel (%p110) target = $region36
        $region35: #{tpu_custom_call.1} parent=23 // pred_region
          %113 = dma.done [#allocation4], 128
        $region36: #{tpu_custom_call.1} parent=23 // pred_fallthru
          _
      $region24: #{tpu_custom_call.1} parent=5 // pred_fallthru
        _
      %p114 = scmp.le.s32.totalorder 2, %s9
      // Predicated region
      $region37: #{tpu_custom_call.1} parent=5 // pred_check
        %p115 = pneg %p114
      $region38: #{tpu_custom_call.1} parent=5 // pred_check_branch
        %117 = sbr.rel (%p115) target = $region40
      $region39: #{tpu_custom_call.1} parent=5 // pred_region
        %s118 = ssub.s32 %s9, 2
      $region40: #{tpu_custom_call.1} parent=5 // pred_fallthru
        _
    $region6: #{tpu_custom_call.1} parent=1 // loop_footer
      %s13 = sadd.s32 1, %s9
    $region7: #{tpu_custom_call.1} parent=1 // loop_footer_branch
      %8 = sbr.rel target = $region3
    $region8: #{tpu_custom_call.1} parent=1 // loop_exit
      _
    %119 = vsyncpa [#allocation3], 1
    %s120 = scalar_lea.sflag [#allocation3], 1
    %121 = vsyncpa %s120, 1
    %122 = vsyncpa [#allocation4], 1
    %s123 = scalar_lea.sflag [#allocation4], 1
    %124 = vsyncpa %s123, 1

// kernel: clip_text_wrapper_forward.7
$region0: #{clip_text_wrapper_forward.7}
  #allocation0 [shape = 'u32[]', space=smem, size = 0x4, offset = 0x4, fixed_abs, tag = 'smem constant byte address 0x4 - core index']
  #allocation1 [shape = 'u32[144,128]{1,0:T(1,128)}', space=vmem, size = 0x12000, scoped, tag = 'internal scratch']
  %s0 = inlined_call_operand.vmem [shape: bf16[16,32], index: 0, kind: input, shape index: {}]
  %s1 = inlined_call_operand.vmem [shape: f32[1,32], index: 1, kind: input, shape index: {}]
  %s2 = inlined_call_operand.vmem [shape: f32[1,32], index: 2, kind: input, shape index: {}]
  %s3 = inlined_call_operand.vmem [shape: bf16[32,96], index: 3, kind: input, shape index: {}]
  %s4 = inlined_call_operand.vmem [shape: f32[1,96], index: 4, kind: input, shape index: {}]
  %s5 = inlined_call_operand.vmem [shape: bf16[16,96], index: 5, kind: output, shape index: {}]
  %s6 = sld [smem:[#allocation0]]
  $region53: #{clip_text_wrapper_forward.7} parent=0
    _
  %s8 = ssub.s32 1, %s6
  %s9 = scalar_select 0, %s8, %s6
  loop: start=0, step=1, limit=4
  $region2: #{clip_text_wrapper_forward.7} parent=0 // loop_pre_header
    _
  $region3: #{clip_text_wrapper_forward.7} parent=0 // loop_header
    %s11 = sphi 0, %s15
    %p12 = scmp.ge.s32.totalorder %s11, 4
    %s21 = sphi 0, %s23
    %s24 = sphi 0, %s21
    %s25 = sphi 0, %s24
    %s41 = sphi 0, %s25
    %s45 = sphi 0, %s45
    %s47 = sphi 0, %s45
    %s48 = sphi 0, %s47
    %s62 = sphi 0, %s48
    %s66 = sphi 0, %s66
    %s68 = sphi 0, %s66
    %s69 = sphi 0, %s68
    %s83 = sphi 0, %s69
    %s87 = sphi 0, %s87
    %s89 = sphi 0, %s87
    %s90 = sphi 0, %s89
    %s104 = sphi 0, %s90
    %s108 = sphi 0, %s108
    %s110 = sphi 0, %s108
    %s111 = sphi 0, %s110
    %s125 = sphi 0, %s111
    %s131 = sphi 0, %s133
    %s134 = sphi 0, %s131
    %s135 = sphi 0, %s134
    %s151 = sphi 0, %s135
  $region4: #{clip_text_wrapper_forward.7} parent=0 // loop_header_branch
    %14 = sbr.rel (%p12) target = $region8
  $region5: #{clip_text_wrapper_forward.7} parent=0 // loop_body
    %s16 = ssub.s32 %s11, 1
    %s17 = ssub.s32 %s11, 2
    %s18 = sadd.s32 %s11, 1
    %s19 = ssub.s32 %s11, %s18
    %p20 = scmp.eq.s32.totalorder %s19, 0
    %s22 = sadd.s32 %s21, 1
    %s23 = scalar_select %p20, %s21, %s22
    %p26 = pneg %p20
    %p27 = scmp.eq.s32.totalorder %s11, 1
    %p28 = por %p26, %p27
    %p29 = scmp.ne.s32.totalorder %s21, %s24
    %p30 = scmp.eq.s32.totalorder %s11, 0
    %p31 = por %p29, %p30
    %p32 = scmp.ne.s32.totalorder %s21, %s24
    %p33 = scmp.eq.s32.totalorder %s16, 1
    %p34 = por %p32, %p33
    %p35 = scmp.ne.s32.totalorder %s24, %s25
    %p36 = scmp.eq.s32.totalorder %s16, 0
    %p37 = por %p35, %p36
    %p38 = scmp.ne.s32.totalorder %s24, %s25
    %p39 = scmp.eq.s32.totalorder %s17, 1
    %p40 = por %p38, %p39
    %p42 = scmp.ne.s32.totalorder %s25, %s41
    %p43 = scmp.eq.s32.totalorder %s17, 0
    %p44 = por %p42, %p43
    %s46 = sadd.s32 %s45, 1
    %p49 = scmp.eq.s32.totalorder %s11, 1
    %p50 = scmp.ne.s32.totalorder %s45, %s47
    %p51 = scmp.eq.s32.totalorder %s11, 0
    %p52 = por %p50, %p51
    %p53 = scmp.ne.s32.totalorder %s45, %s47
    %p54 = scmp.eq.s32.totalorder %s16, 1
    %p55 = por %p53, %p54
    %p56 = scmp.ne.s32.totalorder %s47, %s48
    %p57 = scmp.eq.s32.totalorder %s16, 0
    %p58 = por %p56, %p57
    %p59 = scmp.ne.s32.totalorder %s47, %s48
    %p60 = scmp.eq.s32.totalorder %s17, 1
    %p61 = por %p59, %p60
    %p63 = scmp.ne.s32.totalorder %s48, %s62
    %p64 = scmp.eq.s32.totalorder %s17, 0
    %p65 = por %p63, %p64
    %s67 = sadd.s32 %s66, 1
    %p70 = scmp.eq.s32.totalorder %s11, 1
    %p71 = scmp.ne.s32.totalorder %s66, %s68
    %p72 = scmp.eq.s32.totalorder %s11, 0
    %p73 = por %p71, %p72
    %p74 = scmp.ne.s32.totalorder %s66, %s68
    %p75 = scmp.eq.s32.totalorder %s16, 1
    %p76 = por %p74, %p75
    %p77 = scmp.ne.s32.totalorder %s68, %s69
    %p78 = scmp.eq.s32.totalorder %s16, 0
    %p79 = por %p77, %p78
    %p80 = scmp.ne.s32.totalorder %s68, %s69
    %p81 = scmp.eq.s32.totalorder %s17, 1
    %p82 = por %p80, %p81
    %p84 = scmp.ne.s32.totalorder %s69, %s83
    %p85 = scmp.eq.s32.totalorder %s17, 0
    %p86 = por %p84, %p85
    %s88 = sadd.s32 %s87, 1
    %p91 = scmp.eq.s32.totalorder %s11, 1
    %p92 = scmp.ne.s32.totalorder %s87, %s89
    %p93 = scmp.eq.s32.totalorder %s11, 0
    %p94 = por %p92, %p93
    %p95 = scmp.ne.s32.totalorder %s87, %s89
    %p96 = scmp.eq.s32.totalorder %s16, 1
    %p97 = por %p95, %p96
    %p98 = scmp.ne.s32.totalorder %s89, %s90
    %p99 = scmp.eq.s32.totalorder %s16, 0
    %p100 = por %p98, %p99
    %p101 = scmp.ne.s32.totalorder %s89, %s90
    %p102 = scmp.eq.s32.totalorder %s17, 1
    %p103 = por %p101, %p102
    %p105 = scmp.ne.s32.totalorder %s90, %s104
    %p106 = scmp.eq.s32.totalorder %s17, 0
    %p107 = por %p105, %p106
    %s109 = sadd.s32 %s108, 1
    %p112 = scmp.eq.s32.totalorder %s11, 1
    %p113 = scmp.ne.s32.totalorder %s108, %s110
    %p114 = scmp.eq.s32.totalorder %s11, 0
    %p115 = por %p113, %p114
    %p116 = scmp.ne.s32.totalorder %s108, %s110
    %p117 = scmp.eq.s32.totalorder %s16, 1
    %p118 = por %p116, %p117
    %p119 = scmp.ne.s32.totalorder %s110, %s111
    %p120 = scmp.eq.s32.totalorder %s16, 0
    %p121 = por %p119, %p120
    %p122 = scmp.ne.s32.totalorder %s110, %s111
    %p123 = scmp.eq.s32.totalorder %s17, 1
    %p124 = por %p122, %p123
    %p126 = scmp.ne.s32.totalorder %s111, %s125
    %p127 = scmp.eq.s32.totalorder %s17, 0
    %p128 = por %p126, %p127
    %s129 = ssub.s32 %s11, %s18
    %p130 = scmp.eq.s32.totalorder %s129, 0
    %s132 = sadd.s32 %s131, 1
    %s133 = scalar_select %p130, %s131, %s132
    %p136 = pneg %p130
    %p137 = scmp.eq.s32.totalorder %s11, 1
    %p138 = por %p136, %p137
    %p139 = scmp.ne.s32.totalorder %s131, %s134
    %p140 = scmp.eq.s32.totalorder %s11, 0
    %p141 = por %p139, %p140
    %p142 = scmp.ne.s32.totalorder %s131, %s134
    %p143 = scmp.eq.s32.totalorder %s16, 1
    %p144 = por %p142, %p143
    %p145 = scmp.ne.s32.totalorder %s134, %s135
    %p146 = scmp.eq.s32.totalorder %s16, 0
    %p147 = por %p145, %p146
    %p148 = scmp.ne.s32.totalorder %s134, %s135
    %p149 = scmp.eq.s32.totalorder %s17, 1
    %p150 = por %p148, %p149
    %p152 = scmp.ne.s32.totalorder %s135, %s151
    %p153 = scmp.eq.s32.totalorder %s17, 0
    %p154 = por %p152, %p153
    %p155 = scmp.le.s32.totalorder 1, %s11
    %p156 = scmp.lt.s32.totalorder %s11, 3
    %p157 = pnand %p155, %p156
    %p158 = pneg %p157
    // Predicated region
    $region9: #{clip_text_wrapper_forward.7} parent=5 // pred_check
      _
    $region10: #{clip_text_wrapper_forward.7} parent=5 // pred_check_branch
      %160 = sbr.rel (%p157) target = $region12
    $region11: #{clip_text_wrapper_forward.7} parent=5 // pred_region
      %s161 = ssub.s32 %s11, 1
      // Predicated region
      $region13: #{clip_text_wrapper_forward.7} parent=11 // pred_check
        %p162 = pneg %p58
      $region14: #{clip_text_wrapper_forward.7} parent=11 // pred_check_branch
        %164 = sbr.rel (%p162) target = $region16
      $region15: #{clip_text_wrapper_forward.7} parent=11 // pred_region
        _
      $region16: #{clip_text_wrapper_forward.7} parent=11 // pred_fallthru
        _
      // Predicated region
      $region17: #{clip_text_wrapper_forward.7} parent=11 // pred_check
        %p165 = pneg %p79
      $region18: #{clip_text_wrapper_forward.7} parent=11 // pred_check_branch
        %167 = sbr.rel (%p165) target = $region20
      $region19: #{clip_text_wrapper_forward.7} parent=11 // pred_region
        _
      $region20: #{clip_text_wrapper_forward.7} parent=11 // pred_fallthru
        _
      // Predicated region
      $region21: #{clip_text_wrapper_forward.7} parent=11 // pred_check
        %p168 = pneg %p100
      $region22: #{clip_text_wrapper_forward.7} parent=11 // pred_check_branch
        %170 = sbr.rel (%p168) target = $region24
      $region23: #{clip_text_wrapper_forward.7} parent=11 // pred_region
        _
      $region24: #{clip_text_wrapper_forward.7} parent=11 // pred_fallthru
        _
      // Predicated region
      $region25: #{clip_text_wrapper_forward.7} parent=11 // pred_check
        %p171 = pneg %p121
      $region26: #{clip_text_wrapper_forward.7} parent=11 // pred_check_branch
        %173 = sbr.rel (%p171) target = $region28
      $region27: #{clip_text_wrapper_forward.7} parent=11 // pred_region
        _
      $region28: #{clip_text_wrapper_forward.7} parent=11 // pred_fallthru
        _
    $region12: #{clip_text_wrapper_forward.7} parent=5 // pred_fallthru
      _
    %p174 = scmp.lt.s32.totalorder %s11, 2
    // Predicated region
    $region29: #{clip_text_wrapper_forward.7} parent=5 // pred_check
      %p175 = pneg %p174
    $region30: #{clip_text_wrapper_forward.7} parent=5 // pred_check_branch
      %177 = sbr.rel (%p175) target = $region32
    $region31: #{clip_text_wrapper_forward.7} parent=5 // pred_region
      // Predicated region
      $region33: #{clip_text_wrapper_forward.7} parent=31 // pred_check
        %p178 = pneg %p31
      $region34: #{clip_text_wrapper_forward.7} parent=31 // pred_check_branch
        %180 = sbr.rel (%p178) target = $region36
      $region35: #{clip_text_wrapper_forward.7} parent=31 // pred_region
        %p181 = scmp.lt.s32.totalorder %s11, 1
        %s182 = scalar_select %p181, %s11, 1
        %s183 = smul.addr %s182, 4
        %s184 = scalar_lea.vmem %s0, %s183
      $region36: #{clip_text_wrapper_forward.7} parent=31 // pred_fallthru
        _
    $region32: #{clip_text_wrapper_forward.7} parent=5 // pred_fallthru
      _
    %p185 = scmp.le.s32.totalorder 1, %s11
    %p186 = scmp.lt.s32.totalorder %s11, 3
    %p187 = pnand %p185, %p186
    %p188 = pneg %p187
    // Predicated region
    $region37: #{clip_text_wrapper_forward.7} parent=5 // pred_check
      _
    $region38: #{clip_text_wrapper_forward.7} parent=5 // pred_check_branch
      %190 = sbr.rel (%p187) target = $region40
    $region39: #{clip_text_wrapper_forward.7} parent=5 // pred_region
      %s191 = ssub.s32 %s11, 1
      %p192 = scmp.lt.s32.totalorder %s16, 1
      %s193 = scalar_select %p192, %s16, 1
      %s194 = smul.addr %s193, 4
      %s195 = scalar_lea.vmem %s0, %s194
      %p196 = pneg %p37
      %p197 = pneg %p34
      %p198 = pneg %p58
      %p199 = pneg %p55
      %p200 = pneg %p79
      %p201 = pneg %p76
      %p202 = pneg %p100
      %p203 = pneg %p97
      %p204 = pneg %p121
      %p205 = pneg %p118
      %p206 = pneg %p147
      %p207 = pneg %p144
      %p208 = scmp.lt.s32.totalorder %s16, 1
      %s209 = scalar_select %p208, %s16, 1
      %s210 = smul.addr %s209, 4
      %s211 = scalar_lea.vmem %s5, %s210
      %p212 = scmp.lt.s32.totalorder %s16, 1
      %s213 = scalar_select %p212, %s16, 1
      %s214 = smul.addr %s213, 4
      %s215 = scalar_lea.vmem %s0, %s214
      %p216 = scmp.lt.s32.totalorder %s16, 1
      %s217 = scalar_select %p216, %s16, 1
      %s218 = smul.addr %s217, 4
      %s219 = scalar_lea.vmem %s5, %s218
      %v221 = vld [vmem:[%s215] sm:$0xf]
      %v222 = vunpack.c.l.bf16 %v221
      %vm223 = vcmask 261120
      %v224 = vsel %vm223, %v222, 0.0
      %225 = vadd.xlane.f32.xlu0 %v224
      %v226 = vpop.xlane.xlu0 %225
      %v227 = vrcp.pop 32.0
      %v228 = vmul.f32 %v226, %v227
      %v229 = vsub.f32 %v222, %v228
      %v230 = vmul.f32 %v229, %v229
      %v231 = vsel %vm223, %v230, 0.0
      %232 = vadd.xlane.f32.xlu0 %v231
      %v233 = vpop.xlane.xlu0 %232
      %v234 = vmul.f32 %v233, %v227
      %v235 = vadd.f32 %v234, 1e-05
      %v236 = vrsqrt.pop %v235
      %v237 = vmul.f32 %v229, %v236
      %v238 = vld [vmem:[%s1] sm:$0x1]
      %v240 = vlaneseq
      %v241 = vshrl.u32 %v240, 7
      %v242 = vsub.s32 0, %v241
      %v243 = vrot.slane %v238, %v242
      %v245 = vmul.f32 %v237, %v243
      %v246 = vld [vmem:[%s2] sm:$0x1]
      %v248 = vlaneseq
      %v249 = vshrl.u32 %v248, 7
      %v250 = vsub.s32 0, %v249
      %v251 = vrot.slane %v246, %v250
      %v253 = vadd.f32 %v245, %v251
      %v254 = vpack.c.bf16 %v253, %v253
      %v255 = vld [vmem:[%s3] sm:$0xf]
      %v256 = vld [vmem:[%s3 + $0x4] sm:$0xf]
      %v257 = vld [vmem:[%s3 + $0x8] sm:$0xf]
      %v258 = vld [vmem:[%s3 + $0xc] sm:$0xf]
      %v259 = vld [vmem:[%s4] sm:$0x1]
      %v261 = vlaneseq
      %v262 = vshrl.u32 %v261, 7
      %v263 = vsub.s32 0, %v262
      %v264 = vrot.slane %v259, %v263
      %v270 = vunpack.c.l.b16 %v255
      %v271 = vunpack.c.l.b16 %v256
      %v272 = vunpack.c.l.b16 %v257
      %v273 = vunpack.c.l.b16 %v258
      %v274 = vpack.c.b16 %v271, %v270
      %v275 = vpack.c.b16 %v273, %v272
      %v279 = vsel %vm223, %v254, 0
      %281 = vmatprep.subr.bf16.mxu0 0
      %282 = vmatpush1.bf16.msra.mxu0 0
      %283 = vmatprep.subr.bf16.mxu0 0
      %284 = vmatpush1.bf16.msra.mxu0 0
      %285 = vmatprep.subr.bf16.mxu0 0
      %286 = vmatpush1.bf16.msra.mxu0 0
      %287 = vmatprep.subr.bf16.mxu0 0
      %288 = vmatpush1.bf16.msra.mxu0 0
      %289 = vmatprep.subr.bf16.mxu0 0
      %290 = vmatpush1.bf16.msra.mxu0 0
      %291 = vmatprep.subr.bf16.mxu0 0
      %292 = vmatpush1.bf16.msra.mxu0 0
      %293 = vmatprep.subr.bf16.mxu0 0
      %294 = vmatpush1.bf16.msra.mxu0 %v275
      %295 = vmatprep.subr.bf16.mxu0 0
      %296 = vmatpush1.bf16.msra.mxu0 %v274
      %297 = vmatprep.subr.bf16.mxu0 0
      %298 = vmatpush2.bf16.msra.mxu0 0
      %299 = vmatprep.subr.bf16.mxu0 0
      %300 = vmatpush2.bf16.msra.mxu0 0
      %301 = vmatprep.subr.bf16.mxu0 0
      %302 = vmatpush2.bf16.msra.mxu0 0
      %303 = vmatprep.subr.bf16.mxu0 0
      %304 = vmatpush2.bf16.msra.mxu0 0
      %305 = vmatprep.subr.bf16.mxu0 0
      %306 = vmatpush2.bf16.msra.mxu0 0
      %307 = vmatprep.subr.bf16.mxu0 0
      %308 = vmatpush2.bf16.msra.mxu0 0
      %309 = vmatprep.subr.bf16.mxu0 0
      %310 = vmatpush2.bf16.msra.mxu0 0
      %311 = vmatprep.subr.bf16.mxu0 0
      %312 = vmatpush2.bf16.msra.mxu0 0
      %313 = vmatprep.mubr.bf16.mxu0 0
      %314 = vmatmul.mubr.bf16.gmra.mxu0 %v279
      %v315 = vpop.f32.mrf.mxu0
      %v316 = vadd.f32 %v264, %v315
      %v317 = vpop.f32.mrf.mxu0
      %v318 = vpop.f32.mrf.mxu0
      %v319 = vpop.f32.mrf.mxu0
      %320 = vdwg.mxu0
      %v321 = vpack.c.bf16 %v316, %v316
      %vm322 = vcmask 781312
      %323 = vst.msk [vmem:[%s219] sm:$0xf] %vm322, %v321
      %p324 = scmp.lt.s32.totalorder %s16, 1
      %s325 = scalar_select %p324, %s16, 1
      %s326 = smul.addr %s325, 4
      %s327 = scalar_lea.vmem %s5, %s326
      // Predicated region
      $region41: #{clip_text_wrapper_forward.7} parent=39 // pred_check
        %p328 = pneg %p144
      $region42: #{clip_text_wrapper_forward.7} parent=39 // pred_check_branch
        %330 = sbr.rel (%p328) target = $region44
      $region43: #{clip_text_wrapper_forward.7} parent=39 // pred_region
        _
      $region44: #{clip_text_wrapper_forward.7} parent=39 // pred_fallthru
        _
    $region40: #{clip_text_wrapper_forward.7} parent=5 // pred_fallthru
      _
    %p331 = scmp.le.s32.totalorder 2, %s11
    // Predicated region
    $region45: #{clip_text_wrapper_forward.7} parent=5 // pred_check
      %p332 = pneg %p331
    $region46: #{clip_text_wrapper_forward.7} parent=5 // pred_check_branch
      %334 = sbr.rel (%p332) target = $region48
    $region47: #{clip_text_wrapper_forward.7} parent=5 // pred_region
      %s335 = ssub.s32 %s11, 2
      // Predicated region
      $region49: #{clip_text_wrapper_forward.7} parent=47 // pred_check
        %p336 = pneg %p150
      $region50: #{clip_text_wrapper_forward.7} parent=47 // pred_check_branch
        %338 = sbr.rel (%p336) target = $region52
      $region51: #{clip_text_wrapper_forward.7} parent=47 // pred_region
        %p339 = scmp.lt.s32.totalorder %s17, 1
        %s340 = scalar_select %p339, %s17, 1
        %s341 = smul.addr %s340, 4
        %s342 = scalar_lea.vmem %s5, %s341
      $region52: #{clip_text_wrapper_forward.7} parent=47 // pred_fallthru
        _
    $region48: #{clip_text_wrapper_forward.7} parent=5 // pred_fallthru
      _
  $region6: #{clip_text_wrapper_forward.7} parent=0 // loop_footer
    %s15 = sadd.s32 1, %s11
  $region7: #{clip_text_wrapper_forward.7} parent=0 // loop_footer_branch
    %10 = sbr.rel target = $region3
  $region8: #{clip_text_wrapper_forward.7} parent=0 // loop_exit
    _

// kernel: clip_text_wrapper_forward.9
$region0: #{clip_text_wrapper_forward.9}
  #allocation0 [shape = 'u32[]', space=smem, size = 0x4, offset = 0x4, fixed_abs, tag = 'smem constant byte address 0x4 - core index']
  #allocation1 [shape = 'u32[144,128]{1,0:T(1,128)}', space=vmem, size = 0x12000, scoped, tag = 'internal scratch']
  %s0 = inlined_call_operand.vmem [shape: bf16[16,32], index: 0, kind: input, shape index: {}]
  %s1 = inlined_call_operand.vmem [shape: f32[1,32], index: 1, kind: input, shape index: {}]
  %s2 = inlined_call_operand.vmem [shape: f32[1,32], index: 2, kind: input, shape index: {}]
  %s3 = inlined_call_operand.vmem [shape: bf16[32,64], index: 3, kind: input, shape index: {}]
  %s4 = inlined_call_operand.vmem [shape: f32[1,64], index: 4, kind: input, shape index: {}]
  %s5 = inlined_call_operand.vmem [shape: bf16[64,32], index: 5, kind: input, shape index: {}]
  %s6 = inlined_call_operand.vmem [shape: f32[1,32], index: 6, kind: input, shape index: {}]
  %s7 = inlined_call_operand.vmem [shape: bf16[16,32], index: 7, kind: output, shape index: {}]
  %s8 = sld [smem:[#allocation0]]
  $region61: #{clip_text_wrapper_forward.9} parent=0
    _
  %s10 = ssub.s32 1, %s8
  %s11 = scalar_select 0, %s10, %s8
  loop: start=0, step=1, limit=4
  $region2: #{clip_text_wrapper_forward.9} parent=0 // loop_pre_header
    _
  $region3: #{clip_text_wrapper_forward.9} parent=0 // loop_header
    %s13 = sphi 0, %s17
    %p14 = scmp.ge.s32.totalorder %s13, 4
    %s23 = sphi 0, %s25
    %s26 = sphi 0, %s23
    %s27 = sphi 0, %s26
    %s43 = sphi 0, %s27
    %s47 = sphi 0, %s47
    %s49 = sphi 0, %s47
    %s50 = sphi 0, %s49
    %s64 = sphi 0, %s50
    %s68 = sphi 0, %s68
    %s70 = sphi 0, %s68
    %s71 = sphi 0, %s70
    %s85 = sphi 0, %s71
    %s89 = sphi 0, %s89
    %s91 = sphi 0, %s89
    %s92 = sphi 0, %s91
    %s106 = sphi 0, %s92
    %s110 = sphi 0, %s110
    %s112 = sphi 0, %s110
    %s113 = sphi 0, %s112
    %s127 = sphi 0, %s113
    %s131 = sphi 0, %s131
    %s133 = sphi 0, %s131
    %s134 = sphi 0, %s133
    %s148 = sphi 0, %s134
    %s152 = sphi 0, %s152
    %s154 = sphi 0, %s152
    %s155 = sphi 0, %s154
    %s169 = sphi 0, %s155
    %s175 = sphi 0, %s177
    %s178 = sphi 0, %s175
    %s179 = sphi 0, %s178
    %s195 = sphi 0, %s179
  $region4: #{clip_text_wrapper_forward.9} parent=0 // loop_header_branch
    %16 = sbr.rel (%p14) target = $region8
  $region5: #{clip_text_wrapper_forward.9} parent=0 // loop_body
    %s18 = ssub.s32 %s13, 1
    %s19 = ssub.s32 %s13, 2
    %s20 = sadd.s32 %s13, 1
    %s21 = ssub.s32 %s13, %s20
    %p22 = scmp.eq.s32.totalorder %s21, 0
    %s24 = sadd.s32 %s23, 1
    %s25 = scalar_select %p22, %s23, %s24
    %p28 = pneg %p22
    %p29 = scmp.eq.s32.totalorder %s13, 1
    %p30 = por %p28, %p29
    %p31 = scmp.ne.s32.totalorder %s23, %s26
    %p32 = scmp.eq.s32.totalorder %s13, 0
    %p33 = por %p31, %p32
    %p34 = scmp.ne.s32.totalorder %s23, %s26
    %p35 = scmp.eq.s32.totalorder %s18, 1
    %p36 = por %p34, %p35
    %p37 = scmp.ne.s32.totalorder %s26, %s27
    %p38 = scmp.eq.s32.totalorder %s18, 0
    %p39 = por %p37, %p38
    %p40 = scmp.ne.s32.totalorder %s26, %s27
    %p41 = scmp.eq.s32.totalorder %s19, 1
    %p42 = por %p40, %p41
    %p44 = scmp.ne.s32.totalorder %s27, %s43
    %p45 = scmp.eq.s32.totalorder %s19, 0
    %p46 = por %p44, %p45
    %s48 = sadd.s32 %s47, 1
    %p51 = scmp.eq.s32.totalorder %s13, 1
    %p52 = scmp.ne.s32.totalorder %s47, %s49
    %p53 = scmp.eq.s32.totalorder %s13, 0
    %p54 = por %p52, %p53
    %p55 = scmp.ne.s32.totalorder %s47, %s49
    %p56 = scmp.eq.s32.totalorder %s18, 1
    %p57 = por %p55, %p56
    %p58 = scmp.ne.s32.totalorder %s49, %s50
    %p59 = scmp.eq.s32.totalorder %s18, 0
    %p60 = por %p58, %p59
    %p61 = scmp.ne.s32.totalorder %s49, %s50
    %p62 = scmp.eq.s32.totalorder %s19, 1
    %p63 = por %p61, %p62
    %p65 = scmp.ne.s32.totalorder %s50, %s64
    %p66 = scmp.eq.s32.totalorder %s19, 0
    %p67 = por %p65, %p66
    %s69 = sadd.s32 %s68, 1
    %p72 = scmp.eq.s32.totalorder %s13, 1
    %p73 = scmp.ne.s32.totalorder %s68, %s70
    %p74 = scmp.eq.s32.totalorder %s13, 0
    %p75 = por %p73, %p74
    %p76 = scmp.ne.s32.totalorder %s68, %s70
    %p77 = scmp.eq.s32.totalorder %s18, 1
    %p78 = por %p76, %p77
    %p79 = scmp.ne.s32.totalorder %s70, %s71
    %p80 = scmp.eq.s32.totalorder %s18, 0
    %p81 = por %p79, %p80
    %p82 = scmp.ne.s32.totalorder %s70, %s71
    %p83 = scmp.eq.s32.totalorder %s19, 1
    %p84 = por %p82, %p83
    %p86 = scmp.ne.s32.totalorder %s71, %s85
    %p87 = scmp.eq.s32.totalorder %s19, 0
    %p88 = por %p86, %p87
    %s90 = sadd.s32 %s89, 1
    %p93 = scmp.eq.s32.totalorder %s13, 1
    %p94 = scmp.ne.s32.totalorder %s89, %s91
    %p95 = scmp.eq.s32.totalorder %s13, 0
    %p96 = por %p94, %p95
    %p97 = scmp.ne.s32.totalorder %s89, %s91
    %p98 = scmp.eq.s32.totalorder %s18, 1
    %p99 = por %p97, %p98
    %p100 = scmp.ne.s32.totalorder %s91, %s92
    %p101 = scmp.eq.s32.totalorder %s18, 0
    %p102 = por %p100, %p101
    %p103 = scmp.ne.s32.totalorder %s91, %s92
    %p104 = scmp.eq.s32.totalorder %s19, 1
    %p105 = por %p103, %p104
    %p107 = scmp.ne.s32.totalorder %s92, %s106
    %p108 = scmp.eq.s32.totalorder %s19, 0
    %p109 = por %p107, %p108
    %s111 = sadd.s32 %s110, 1
    %p114 = scmp.eq.s32.totalorder %s13, 1
    %p115 = scmp.ne.s32.totalorder %s110, %s112
    %p116 = scmp.eq.s32.totalorder %s13, 0
    %p117 = por %p115, %p116
    %p118 = scmp.ne.s32.totalorder %s110, %s112
    %p119 = scmp.eq.s32.totalorder %s18, 1
    %p120 = por %p118, %p119
    %p121 = scmp.ne.s32.totalorder %s112, %s113
    %p122 = scmp.eq.s32.totalorder %s18, 0
    %p123 = por %p121, %p122
    %p124 = scmp.ne.s32.totalorder %s112, %s113
    %p125 = scmp.eq.s32.totalorder %s19, 1
    %p126 = por %p124, %p125
    %p128 = scmp.ne.s32.totalorder %s113, %s127
    %p129 = scmp.eq.s32.totalorder %s19, 0
    %p130 = por %p128, %p129
    %s132 = sadd.s32 %s131, 1
    %p135 = scmp.eq.s32.totalorder %s13, 1
    %p136 = scmp.ne.s32.totalorder %s131, %s133
    %p137 = scmp.eq.s32.totalorder %s13, 0
    %p138 = por %p136, %p137
    %p139 = scmp.ne.s32.totalorder %s131, %s133
    %p140 = scmp.eq.s32.totalorder %s18, 1
    %p141 = por %p139, %p140
    %p142 = scmp.ne.s32.totalorder %s133, %s134
    %p143 = scmp.eq.s32.totalorder %s18, 0
    %p144 = por %p142, %p143
    %p145 = scmp.ne.s32.totalorder %s133, %s134
    %p146 = scmp.eq.s32.totalorder %s19, 1
    %p147 = por %p145, %p146
    %p149 = scmp.ne.s32.totalorder %s134, %s148
    %p150 = scmp.eq.s32.totalorder %s19, 0
    %p151 = por %p149, %p150
    %s153 = sadd.s32 %s152, 1
    %p156 = scmp.eq.s32.totalorder %s13, 1
    %p157 = scmp.ne.s32.totalorder %s152, %s154
    %p158 = scmp.eq.s32.totalorder %s13, 0
    %p159 = por %p157, %p158
    %p160 = scmp.ne.s32.totalorder %s152, %s154
    %p161 = scmp.eq.s32.totalorder %s18, 1
    %p162 = por %p160, %p161
    %p163 = scmp.ne.s32.totalorder %s154, %s155
    %p164 = scmp.eq.s32.totalorder %s18, 0
    %p165 = por %p163, %p164
    %p166 = scmp.ne.s32.totalorder %s154, %s155
    %p167 = scmp.eq.s32.totalorder %s19, 1
    %p168 = por %p166, %p167
    %p170 = scmp.ne.s32.totalorder %s155, %s169
    %p171 = scmp.eq.s32.totalorder %s19, 0
    %p172 = por %p170, %p171
    %s173 = ssub.s32 %s13, %s20
    %p174 = scmp.eq.s32.totalorder %s173, 0
    %s176 = sadd.s32 %s175, 1
    %s177 = scalar_select %p174, %s175, %s176
    %p180 = pneg %p174
    %p181 = scmp.eq.s32.totalorder %s13, 1
    %p182 = por %p180, %p181
    %p183 = scmp.ne.s32.totalorder %s175, %s178
    %p184 = scmp.eq.s32.totalorder %s13, 0
    %p185 = por %p183, %p184
    %p186 = scmp.ne.s32.totalorder %s175, %s178
    %p187 = scmp.eq.s32.totalorder %s18, 1
    %p188 = por %p186, %p187
    %p189 = scmp.ne.s32.totalorder %s178, %s179
    %p190 = scmp.eq.s32.totalorder %s18, 0
    %p191 = por %p189, %p190
    %p192 = scmp.ne.s32.totalorder %s178, %s179
    %p193 = scmp.eq.s32.totalorder %s19, 1
    %p194 = por %p192, %p193
    %p196 = scmp.ne.s32.totalorder %s179, %s195
    %p197 = scmp.eq.s32.totalorder %s19, 0
    %p198 = por %p196, %p197
    %p199 = scmp.le.s32.totalorder 1, %s13
    %p200 = scmp.lt.s32.totalorder %s13, 3
    %p201 = pnand %p199, %p200
    %p202 = pneg %p201
    // Predicated region
    $region9: #{clip_text_wrapper_forward.9} parent=5 // pred_check
      _
    $region10: #{clip_text_wrapper_forward.9} parent=5 // pred_check_branch
      %204 = sbr.rel (%p201) target = $region12
    $region11: #{clip_text_wrapper_forward.9} parent=5 // pred_region
      %s205 = ssub.s32 %s13, 1
      // Predicated region
      $region13: #{clip_text_wrapper_forward.9} parent=11 // pred_check
        %p206 = pneg %p60
      $region14: #{clip_text_wrapper_forward.9} parent=11 // pred_check_branch
        %208 = sbr.rel (%p206) target = $region16
      $region15: #{clip_text_wrapper_forward.9} parent=11 // pred_region
        _
      $region16: #{clip_text_wrapper_forward.9} parent=11 // pred_fallthru
        _
      // Predicated region
      $region17: #{clip_text_wrapper_forward.9} parent=11 // pred_check
        %p209 = pneg %p81
      $region18: #{clip_text_wrapper_forward.9} parent=11 // pred_check_branch
        %211 = sbr.rel (%p209) target = $region20
      $region19: #{clip_text_wrapper_forward.9} parent=11 // pred_region
        _
      $region20: #{clip_text_wrapper_forward.9} parent=11 // pred_fallthru
        _
      // Predicated region
      $region21: #{clip_text_wrapper_forward.9} parent=11 // pred_check
        %p212 = pneg %p102
      $region22: #{clip_text_wrapper_forward.9} parent=11 // pred_check_branch
        %214 = sbr.rel (%p212) target = $region24
      $region23: #{clip_text_wrapper_forward.9} parent=11 // pred_region
        _
      $region24: #{clip_text_wrapper_forward.9} parent=11 // pred_fallthru
        _
      // Predicated region
      $region25: #{clip_text_wrapper_forward.9} parent=11 // pred_check
        %p215 = pneg %p123
      $region26: #{clip_text_wrapper_forward.9} parent=11 // pred_check_branch
        %217 = sbr.rel (%p215) target = $region28
      $region27: #{clip_text_wrapper_forward.9} parent=11 // pred_region
        _
      $region28: #{clip_text_wrapper_forward.9} parent=11 // pred_fallthru
        _
      // Predicated region
      $region29: #{clip_text_wrapper_forward.9} parent=11 // pred_check
        %p218 = pneg %p144
      $region30: #{clip_text_wrapper_forward.9} parent=11 // pred_check_branch
        %220 = sbr.rel (%p218) target = $region32
      $region31: #{clip_text_wrapper_forward.9} parent=11 // pred_region
        _
      $region32: #{clip_text_wrapper_forward.9} parent=11 // pred_fallthru
        _
      // Predicated region
      $region33: #{clip_text_wrapper_forward.9} parent=11 // pred_check
        %p221 = pneg %p165
      $region34: #{clip_text_wrapper_forward.9} parent=11 // pred_check_branch
        %223 = sbr.rel (%p221) target = $region36
      $region35: #{clip_text_wrapper_forward.9} parent=11 // pred_region
        _
      $region36: #{clip_text_wrapper_forward.9} parent=11 // pred_fallthru
        _
    $region12: #{clip_text_wrapper_forward.9} parent=5 // pred_fallthru
      _
    %p224 = scmp.lt.s32.totalorder %s13, 2
    // Predicated region
    $region37: #{clip_text_wrapper_forward.9} parent=5 // pred_check
      %p225 = pneg %p224
    $region38: #{clip_text_wrapper_forward.9} parent=5 // pred_check_branch
      %227 = sbr.rel (%p225) target = $region40
    $region39: #{clip_text_wrapper_forward.9} parent=5 // pred_region
      // Predicated region
      $region41: #{clip_text_wrapper_forward.9} parent=39 // pred_check
        %p228 = pneg %p33
      $region42: #{clip_text_wrapper_forward.9} parent=39 // pred_check_branch
        %230 = sbr.rel (%p228) target = $region44
      $region43: #{clip_text_wrapper_forward.9} parent=39 // pred_region
        %p231 = scmp.lt.s32.totalorder %s13, 1
        %s232 = scalar_select %p231, %s13, 1
        %s233 = smul.addr %s232, 4
        %s234 = scalar_lea.vmem %s0, %s233
      $region44: #{clip_text_wrapper_forward.9} parent=39 // pred_fallthru
        _
    $region40: #{clip_text_wrapper_forward.9} parent=5 // pred_fallthru
      _
    %p235 = scmp.le.s32.totalorder 1, %s13
    %p236 = scmp.lt.s32.totalorder %s13, 3
    %p237 = pnand %p235, %p236
    %p238 = pneg %p237
    // Predicated region
    $region45: #{clip_text_wrapper_forward.9} parent=5 // pred_check
      _
    $region46: #{clip_text_wrapper_forward.9} parent=5 // pred_check_branch
      %240 = sbr.rel (%p237) target = $region48
    $region47: #{clip_text_wrapper_forward.9} parent=5 // pred_region
      %s241 = ssub.s32 %s13, 1
      %p242 = scmp.lt.s32.totalorder %s18, 1
      %s243 = scalar_select %p242, %s18, 1
      %s244 = smul.addr %s243, 4
      %s245 = scalar_lea.vmem %s0, %s244
      %p246 = pneg %p39
      %p247 = pneg %p36
      %p248 = pneg %p60
      %p249 = pneg %p57
      %p250 = pneg %p81
      %p251 = pneg %p78
      %p252 = pneg %p102
      %p253 = pneg %p99
      %p254 = pneg %p123
      %p255 = pneg %p120
      %p256 = pneg %p144
      %p257 = pneg %p141
      %p258 = pneg %p165
      %p259 = pneg %p162
      %p260 = pneg %p191
      %p261 = pneg %p188
      %p262 = scmp.lt.s32.totalorder %s18, 1
      %s263 = scalar_select %p262, %s18, 1
      %s264 = smul.addr %s263, 4
      %s265 = scalar_lea.vmem %s7, %s264
      %p266 = scmp.lt.s32.totalorder %s18, 1
      %s267 = scalar_select %p266, %s18, 1
      %s268 = smul.addr %s267, 4
      %s269 = scalar_lea.vmem %s0, %s268
      %p270 = scmp.lt.s32.totalorder %s18, 1
      %s271 = scalar_select %p270, %s18, 1
      %s272 = smul.addr %s271, 4
      %s273 = scalar_lea.vmem %s7, %s272
      %v275 = vld [vmem:[%s269] sm:$0xf]
      %v276 = vunpack.c.l.bf16 %v275
      %vm277 = vcmask 261120
      %v278 = vsel %vm277, %v276, 0.0
      %279 = vadd.xlane.f32.xlu0 %v278
      %v280 = vpop.xlane.xlu0 %279
      %v281 = vrcp.pop 32.0
      %v282 = vmul.f32 %v280, %v281
      %v283 = vsub.f32 %v276, %v282
      %v284 = vmul.f32 %v283, %v283
      %v285 = vsel %vm277, %v284, 0.0
      %286 = vadd.xlane.f32.xlu0 %v285
      %v287 = vpop.xlane.xlu0 %286
      %v288 = vmul.f32 %v287, %v281
      %v289 = vadd.f32 %v288, 1e-05
      %v290 = vrsqrt.pop %v289
      %v291 = vmul.f32 %v283, %v290
      %v292 = vld [vmem:[%s1] sm:$0x1]
      %v294 = vlaneseq
      %v295 = vshrl.u32 %v294, 7
      %v296 = vsub.s32 0, %v295
      %v297 = vrot.slane %v292, %v296
      %v299 = vmul.f32 %v291, %v297
      %v300 = vld [vmem:[%s2] sm:$0x1]
      %v302 = vlaneseq
      %v303 = vshrl.u32 %v302, 7
      %v304 = vsub.s32 0, %v303
      %v305 = vrot.slane %v300, %v304
      %v307 = vadd.f32 %v299, %v305
      %v308 = vpack.c.bf16 %v307, %v307
      %v309 = vld [vmem:[%s3] sm:$0xf]
      %v310 = vld [vmem:[%s3 + $0x4] sm:$0xf]
      %v311 = vld [vmem:[%s3 + $0x8] sm:$0xf]
      %v312 = vld [vmem:[%s3 + $0xc] sm:$0xf]
      %v313 = vld [vmem:[%s4] sm:$0x1]
      %v315 = vlaneseq
      %v316 = vshrl.u32 %v315, 7
      %v317 = vsub.s32 0, %v316
      %v318 = vrot.slane %v313, %v317
      %v324 = vunpack.c.l.b16 %v309
      %v325 = vunpack.c.l.b16 %v310
      %v326 = vunpack.c.l.b16 %v311
      %v327 = vunpack.c.l.b16 %v312
      %v328 = vpack.c.b16 %v325, %v324
      %v329 = vpack.c.b16 %v327, %v326
      %v333 = vsel %vm277, %v308, 0
      %335 = vmatprep.subr.bf16.mxu0 0
      %336 = vmatpush1.bf16.msra.mxu0 0
      %337 = vmatprep.subr.bf16.mxu0 0
      %338 = vmatpush1.bf16.msra.mxu0 0
      %339 = vmatprep.subr.bf16.mxu0 0
      %340 = vmatpush1.bf16.msra.mxu0 0
      %341 = vmatprep.subr.bf16.mxu0 0
      %342 = vmatpush1.bf16.msra.mxu0 0
      %343 = vmatprep.subr.bf16.mxu0 0
      %344 = vmatpush1.bf16.msra.mxu0 0
      %345 = vmatprep.subr.bf16.mxu0 0
      %346 = vmatpush1.bf16.msra.mxu0 0
      %347 = vmatprep.subr.bf16.mxu0 0
      %348 = vmatpush1.bf16.msra.mxu0 %v329
      %349 = vmatprep.subr.bf16.mxu0 0
      %350 = vmatpush1.bf16.msra.mxu0 %v328
      %351 = vmatprep.subr.bf16.mxu0 0
      %352 = vmatpush2.bf16.msra.mxu0 0
      %353 = vmatprep.subr.bf16.mxu0 0
      %354 = vmatpush2.bf16.msra.mxu0 0
      %355 = vmatprep.subr.bf16.mxu0 0
      %356 = vmatpush2.bf16.msra.mxu0 0
      %357 = vmatprep.subr.bf16.mxu0 0
      %358 = vmatpush2.bf16.msra.mxu0 0
      %359 = vmatprep.subr.bf16.mxu0 0
      %360 = vmatpush2.bf16.msra.mxu0 0
      %361 = vmatprep.subr.bf16.mxu0 0
      %362 = vmatpush2.bf16.msra.mxu0 0
      %363 = vmatprep.subr.bf16.mxu0 0
      %364 = vmatpush2.bf16.msra.mxu0 0
      %365 = vmatprep.subr.bf16.mxu0 0
      %366 = vmatpush2.bf16.msra.mxu0 0
      %367 = vmatprep.mubr.bf16.mxu0 0
      %368 = vmatmul.mubr.bf16.gmra.mxu0 %v333
      %v369 = vpop.f32.mrf.mxu0
      %v370 = vadd.f32 %v318, %v369
      %v371 = vpop.f32.mrf.mxu0
      %v372 = vpop.f32.mrf.mxu0
      %v373 = vpop.f32.mrf.mxu0
      %374 = vdwg.mxu0
      %v375 = vmul.f32 %v370, -1.702
      %v376 = vmul.f32 %v375, 1.442695
      %v377 = vpow.pop %v376
      %v378 = vadd.f32 %v377, 1.0
      %v379 = vrcp.pop %v378
      %v380 = vmul.f32 %v370, %v379
      %v381 = vpack.c.bf16 %v380, %v380
      %v382 = vld [vmem:[%s5] sm:$0xf]
      %v383 = vld [vmem:[%s5 + $0x4] sm:$0xf]
      %v384 = vld [vmem:[%s5 + $0x8] sm:$0xf]
      %v385 = vld [vmem:[%s5 + $0xc] sm:$0xf]
      %v386 = vld [vmem:[%s5 + $0x10] sm:$0xf]
      %v387 = vld [vmem:[%s5 + $0x14] sm:$0xf]
      %v388 = vld [vmem:[%s5 + $0x18] sm:$0xf]
      %v389 = vld [vmem:[%s5 + $0x1c] sm:$0xf]
      %v390 = vld [vmem:[%s6] sm:$0x1]
      %v392 = vlaneseq
      %v393 = vshrl.u32 %v392, 7
      %v394 = vsub.s32 0, %v393
      %v395 = vrot.slane %v390, %v394
      %v405 = vunpack.c.l.b16 %v382
      %v406 = vunpack.c.l.b16 %v383
      %v407 = vunpack.c.l.b16 %v384
      %v408 = vunpack.c.l.b16 %v385
      %v409 = vunpack.c.l.b16 %v386
      %v410 = vunpack.c.l.b16 %v387
      %v411 = vunpack.c.l.b16 %v388
      %v412 = vunpack.c.l.b16 %v389
      %v413 = vpack.c.b16 %v406, %v405
      %v414 = vpack.c.b16 %v408, %v407
      %v415 = vpack.c.b16 %v410, %v409
      %v416 = vpack.c.b16 %v412, %v411
      %vm421 = vcmask 523264
      %v423 = vsel %vm421, %v381, 0
      %425 = vmatprep.subr.bf16.mxu0 0
      %426 = vmatpush1.bf16.msra.mxu0 0
      %427 = vmatprep.subr.bf16.mxu0 0
      %428 = vmatpush1.bf16.msra.mxu0 0
      %429 = vmatprep.subr.bf16.mxu0 0
      %430 = vmatpush1.bf16.msra.mxu0 0
      %431 = vmatprep.subr.bf16.mxu0 0
      %432 = vmatpush1.bf16.msra.mxu0 0
      %433 = vmatprep.subr.bf16.mxu0 0
      %434 = vmatpush1.bf16.msra.mxu0 %v416
      %435 = vmatprep.subr.bf16.mxu0 0
      %436 = vmatpush1.bf16.msra.mxu0 %v415
      %437 = vmatprep.subr.bf16.mxu0 0
      %438 = vmatpush1.bf16.msra.mxu0 %v414
      %439 = vmatprep.subr.bf16.mxu0 0
      %440 = vmatpush1.bf16.msra.mxu0 %v413
      %441 = vmatprep.subr.bf16.mxu0 0
      %442 = vmatpush2.bf16.msra.mxu0 0
      %443 = vmatprep.subr.bf16.mxu0 0
      %444 = vmatpush2.bf16.msra.mxu0 0
      %445 = vmatprep.subr.bf16.mxu0 0
      %446 = vmatpush2.bf16.msra.mxu0 0
      %447 = vmatprep.subr.bf16.mxu0 0
      %448 = vmatpush2.bf16.msra.mxu0 0
      %449 = vmatprep.subr.bf16.mxu0 0
      %450 = vmatpush2.bf16.msra.mxu0 0
      %451 = vmatprep.subr.bf16.mxu0 0
      %452 = vmatpush2.bf16.msra.mxu0 0
      %453 = vmatprep.subr.bf16.mxu0 0
      %454 = vmatpush2.bf16.msra.mxu0 0
      %455 = vmatprep.subr.bf16.mxu0 0
      %456 = vmatpush2.bf16.msra.mxu0 0
      %457 = vmatprep.mubr.bf16.mxu0 0
      %458 = vmatmul.mubr.bf16.gmra.mxu0 %v423
      %v459 = vpop.f32.mrf.mxu0
      %v460 = vadd.f32 %v395, %v459
      %v461 = vpop.f32.mrf.mxu0
      %v462 = vpop.f32.mrf.mxu0
      %v463 = vpop.f32.mrf.mxu0
      %464 = vdwg.mxu0
      %v465 = vadd.f32 %v460, %v276
      %v466 = vpack.c.bf16 %v465, %v465
      %vm467 = vcmask 257024
      %468 = vst.msk [vmem:[%s273] sm:$0xf] %vm467, %v466
      %p469 = scmp.lt.s32.totalorder %s18, 1
      %s470 = scalar_select %p469, %s18, 1
      %s471 = smul.addr %s470, 4
      %s472 = scalar_lea.vmem %s7, %s471
      // Predicated region
      $region49: #{clip_text_wrapper_forward.9} parent=47 // pred_check
        %p473 = pneg %p188
      $region50: #{clip_text_wrapper_forward.9} parent=47 // pred_check_branch
        %475 = sbr.rel (%p473) target = $region52
      $region51: #{clip_text_wrapper_forward.9} parent=47 // pred_region
        _
      $region52: #{clip_text_wrapper_forward.9} parent=47 // pred_fallthru
        _
    $region48: #{clip_text_wrapper_forward.9} parent=5 // pred_fallthru
      _
    %p476 = scmp.le.s32.totalorder 2, %s13
    // Predicated region
    $region53: #{clip_text_wrapper_forward.9} parent=5 // pred_check
      %p477 = pneg %p476
    $region54: #{clip_text_wrapper_forward.9} parent=5 // pred_check_branch
      %479 = sbr.rel (%p477) target = $region56
    $region55: #{clip_text_wrapper_forward.9} parent=5 // pred_region
      %s480 = ssub.s32 %s13, 2
      // Predicated region
      $region57: #{clip_text_wrapper_forward.9} parent=55 // pred_check
        %p481 = pneg %p194
      $region58: #{clip_text_wrapper_forward.9} parent=55 // pred_check_branch
        %483 = sbr.rel (%p481) target = $region60
      $region59: #{clip_text_wrapper_forward.9} parent=55 // pred_region
        %p484 = scmp.lt.s32.totalorder %s19, 1
        %s485 = scalar_select %p484, %s19, 1
        %s486 = smul.addr %s485, 4
        %s487 = scalar_lea.vmem %s7, %s486
      $region60: #{clip_text_wrapper_forward.9} parent=55 // pred_fallthru
        _
    $region56: #{clip_text_wrapper_forward.9} parent=5 // pred_fallthru
      _
  $region6: #{clip_text_wrapper_forward.9} parent=0 // loop_footer
    %s17 = sadd.s32 1, %s13
  $region7: #{clip_text_wrapper_forward.9} parent=0 // loop_footer_branch
    %12 = sbr.rel target = $region3
  $region8: #{clip_text_wrapper_forward.9} parent=0 // loop_exit
    _

// kernel: clip_text_wrapper_forward.8
$region0: #{clip_text_wrapper_forward.8}
  #allocation0 [shape = 'u32[]', space=smem, size = 0x4, offset = 0x4, fixed_abs, tag = 'smem constant byte address 0x4 - core index']
  #allocation1 [shape = 'u32[144,128]{1,0:T(1,128)}', space=vmem, size = 0x12000, scoped, tag = 'internal scratch']
  %s0 = inlined_call_operand.vmem [shape: bf16[2,8,96], index: 0, kind: input, shape index: {}]
  %s1 = inlined_call_operand.vmem [shape: s32[2,1,8], index: 1, kind: input, shape index: {}]
  %s2 = inlined_call_operand.vmem [shape: bf16[2,8,32], index: 2, kind: input, shape index: {}]
  %s3 = inlined_call_operand.vmem [shape: bf16[4,8,32], index: 3, kind: input, shape index: {}]
  %s4 = inlined_call_operand.vmem [shape: f32[1,32], index: 4, kind: input, shape index: {}]
  %s5 = inlined_call_operand.vmem [shape: bf16[2,8,32], index: 5, kind: output, shape index: {}]
  %s6 = sld [smem:[#allocation0]]
  $region53: #{clip_text_wrapper_forward.8} parent=0
    _
  %s8 = ssub.s32 1, %s6
  %s9 = scalar_select 0, %s8, %s6
  loop: start=0, step=1, limit=4
  $region2: #{clip_text_wrapper_forward.8} parent=0 // loop_pre_header
    _
  $region3: #{clip_text_wrapper_forward.8} parent=0 // loop_header
    %s11 = sphi 0, %s15
    %p12 = scmp.ge.s32.totalorder %s11, 4
    %s21 = sphi 0, %s23
    %s24 = sphi 0, %s21
    %s25 = sphi 0, %s24
    %s41 = sphi 0, %s25
    %s47 = sphi 0, %s49
    %s50 = sphi 0, %s47
    %s51 = sphi 0, %s50
    %s67 = sphi 0, %s51
    %s73 = sphi 0, %s75
    %s76 = sphi 0, %s73
    %s77 = sphi 0, %s76
    %s93 = sphi 0, %s77
    %s97 = sphi 0, %s97
    %s99 = sphi 0, %s97
    %s100 = sphi 0, %s99
    %s114 = sphi 0, %s100
    %s118 = sphi 0, %s118
    %s120 = sphi 0, %s118
    %s121 = sphi 0, %s120
    %s135 = sphi 0, %s121
    %s141 = sphi 0, %s143
    %s144 = sphi 0, %s141
    %s145 = sphi 0, %s144
    %s161 = sphi 0, %s145
  $region4: #{clip_text_wrapper_forward.8} parent=0 // loop_header_branch
    %14 = sbr.rel (%p12) target = $region8
  $region5: #{clip_text_wrapper_forward.8} parent=0 // loop_body
    %s16 = ssub.s32 %s11, 1
    %s17 = ssub.s32 %s11, 2
    %s18 = sadd.s32 %s11, 1
    %s19 = ssub.s32 %s11, %s18
    %p20 = scmp.eq.s32.totalorder %s19, 0
    %s22 = sadd.s32 %s21, 1
    %s23 = scalar_select %p20, %s21, %s22
    %p26 = pneg %p20
    %p27 = scmp.eq.s32.totalorder %s11, 1
    %p28 = por %p26, %p27
    %p29 = scmp.ne.s32.totalorder %s21, %s24
    %p30 = scmp.eq.s32.totalorder %s11, 0
    %p31 = por %p29, %p30
    %p32 = scmp.ne.s32.totalorder %s21, %s24
    %p33 = scmp.eq.s32.totalorder %s16, 1
    %p34 = por %p32, %p33
    %p35 = scmp.ne.s32.totalorder %s24, %s25
    %p36 = scmp.eq.s32.totalorder %s16, 0
    %p37 = por %p35, %p36
    %p38 = scmp.ne.s32.totalorder %s24, %s25
    %p39 = scmp.eq.s32.totalorder %s17, 1
    %p40 = por %p38, %p39
    %p42 = scmp.ne.s32.totalorder %s25, %s41
    %p43 = scmp.eq.s32.totalorder %s17, 0
    %p44 = por %p42, %p43
    %s45 = ssub.s32 %s11, %s18
    %p46 = scmp.eq.s32.totalorder %s45, 0
    %s48 = sadd.s32 %s47, 1
    %s49 = scalar_select %p46, %s47, %s48
    %p52 = pneg %p46
    %p53 = scmp.eq.s32.totalorder %s11, 1
    %p54 = por %p52, %p53
    %p55 = scmp.ne.s32.totalorder %s47, %s50
    %p56 = scmp.eq.s32.totalorder %s11, 0
    %p57 = por %p55, %p56
    %p58 = scmp.ne.s32.totalorder %s47, %s50
    %p59 = scmp.eq.s32.totalorder %s16, 1
    %p60 = por %p58, %p59
    %p61 = scmp.ne.s32.totalorder %s50, %s51
    %p62 = scmp.eq.s32.totalorder %s16, 0
    %p63 = por %p61, %p62
    %p64 = scmp.ne.s32.totalorder %s50, %s51
    %p65 = scmp.eq.s32.totalorder %s17, 1
    %p66 = por %p64, %p65
    %p68 = scmp.ne.s32.totalorder %s51, %s67
    %p69 = scmp.eq.s32.totalorder %s17, 0
    %p70 = por %p68, %p69
    %s71 = ssub.s32 %s11, %s18
    %p72 = scmp.eq.s32.totalorder %s71, 0
    %s74 = sadd.s32 %s73, 1
    %s75 = scalar_select %p72, %s73, %s74
    %p78 = pneg %p72
    %p79 = scmp.eq.s32.totalorder %s11, 1
    %p80 = por %p78, %p79
    %p81 = scmp.ne.s32.totalorder %s73, %s76
    %p82 = scmp.eq.s32.totalorder %s11, 0
    %p83 = por %p81, %p82
    %p84 = scmp.ne.s32.totalorder %s73, %s76
    %p85 = scmp.eq.s32.totalorder %s16, 1
    %p86 = por %p84, %p85
    %p87 = scmp.ne.s32.totalorder %s76, %s77
    %p88 = scmp.eq.s32.totalorder %s16, 0
    %p89 = por %p87, %p88
    %p90 = scmp.ne.s32.totalorder %s76, %s77
    %p91 = scmp.eq.s32.totalorder %s17, 1
    %p92 = por %p90, %p91
    %p94 = scmp.ne.s32.totalorder %s77, %s93
    %p95 = scmp.eq.s32.totalorder %s17, 0
    %p96 = por %p94, %p95
    %s98 = sadd.s32 %s97, 1
    %p101 = scmp.eq.s32.totalorder %s11, 1
    %p102 = scmp.ne.s32.totalorder %s97, %s99
    %p103 = scmp.eq.s32.totalorder %s11, 0
    %p104 = por %p102, %p103
    %p105 = scmp.ne.s32.totalorder %s97, %s99
    %p106 = scmp.eq.s32.totalorder %s16, 1
    %p107 = por %p105, %p106
    %p108 = scmp.ne.s32.totalorder %s99, %s100
    %p109 = scmp.eq.s32.totalorder %s16, 0
    %p110 = por %p108, %p109
    %p111 = scmp.ne.s32.totalorder %s99, %s100
    %p112 = scmp.eq.s32.totalorder %s17, 1
    %p113 = por %p111, %p112
    %p115 = scmp.ne.s32.totalorder %s100, %s114
    %p116 = scmp.eq.s32.totalorder %s17, 0
    %p117 = por %p115, %p116
    %s119 = sadd.s32 %s118, 1
    %p122 = scmp.eq.s32.totalorder %s11, 1
    %p123 = scmp.ne.s32.totalorder %s118, %s120
    %p124 = scmp.eq.s32.totalorder %s11, 0
    %p125 = por %p123, %p124
    %p126 = scmp.ne.s32.totalorder %s118, %s120
    %p127 = scmp.eq.s32.totalorder %s16, 1
    %p128 = por %p126, %p127
    %p129 = scmp.ne.s32.totalorder %s120, %s121
    %p130 = scmp.eq.s32.totalorder %s16, 0
    %p131 = por %p129, %p130
    %p132 = scmp.ne.s32.totalorder %s120, %s121
    %p133 = scmp.eq.s32.totalorder %s17, 1
    %p134 = por %p132, %p133
    %p136 = scmp.ne.s32.totalorder %s121, %s135
    %p137 = scmp.eq.s32.totalorder %s17, 0
    %p138 = por %p136, %p137
    %s139 = ssub.s32 %s11, %s18
    %p140 = scmp.eq.s32.totalorder %s139, 0
    %s142 = sadd.s32 %s141, 1
    %s143 = scalar_select %p140, %s141, %s142
    %p146 = pneg %p140
    %p147 = scmp.eq.s32.totalorder %s11, 1
    %p148 = por %p146, %p147
    %p149 = scmp.ne.s32.totalorder %s141, %s144
    %p150 = scmp.eq.s32.totalorder %s11, 0
    %p151 = por %p149, %p150
    %p152 = scmp.ne.s32.totalorder %s141, %s144
    %p153 = scmp.eq.s32.totalorder %s16, 1
    %p154 = por %p152, %p153
    %p155 = scmp.ne.s32.totalorder %s144, %s145
    %p156 = scmp.eq.s32.totalorder %s16, 0
    %p157 = por %p155, %p156
    %p158 = scmp.ne.s32.totalorder %s144, %s145
    %p159 = scmp.eq.s32.totalorder %s17, 1
    %p160 = por %p158, %p159
    %p162 = scmp.ne.s32.totalorder %s145, %s161
    %p163 = scmp.eq.s32.totalorder %s17, 0
    %p164 = por %p162, %p163
    %p165 = scmp.le.s32.totalorder 1, %s11
    %p166 = scmp.lt.s32.totalorder %s11, 3
    %p167 = pnand %p165, %p166
    %p168 = pneg %p167
    // Predicated region
    $region9: #{clip_text_wrapper_forward.8} parent=5 // pred_check
      _
    $region10: #{clip_text_wrapper_forward.8} parent=5 // pred_check_branch
      %170 = sbr.rel (%p167) target = $region12
    $region11: #{clip_text_wrapper_forward.8} parent=5 // pred_region
      %s171 = ssub.s32 %s11, 1
      // Predicated region
      $region13: #{clip_text_wrapper_forward.8} parent=11 // pred_check
        %p172 = pneg %p110
      $region14: #{clip_text_wrapper_forward.8} parent=11 // pred_check_branch
        %174 = sbr.rel (%p172) target = $region16
      $region15: #{clip_text_wrapper_forward.8} parent=11 // pred_region
        _
      $region16: #{clip_text_wrapper_forward.8} parent=11 // pred_fallthru
        _
      // Predicated region
      $region17: #{clip_text_wrapper_forward.8} parent=11 // pred_check
        %p175 = pneg %p131
      $region18: #{clip_text_wrapper_forward.8} parent=11 // pred_check_branch
        %177 = sbr.rel (%p175) target = $region20
      $region19: #{clip_text_wrapper_forward.8} parent=11 // pred_region
        _
      $region20: #{clip_text_wrapper_forward.8} parent=11 // pred_fallthru
        _
    $region12: #{clip_text_wrapper_forward.8} parent=5 // pred_fallthru
      _
    %p178 = scmp.lt.s32.totalorder %s11, 2
    // Predicated region
    $region21: #{clip_text_wrapper_forward.8} parent=5 // pred_check
      %p179 = pneg %p178
    $region22: #{clip_text_wrapper_forward.8} parent=5 // pred_check_branch
      %181 = sbr.rel (%p179) target = $region24
    $region23: #{clip_text_wrapper_forward.8} parent=5 // pred_region
      // Predicated region
      $region25: #{clip_text_wrapper_forward.8} parent=23 // pred_check
        %p182 = pneg %p31
      $region26: #{clip_text_wrapper_forward.8} parent=23 // pred_check_branch
        %184 = sbr.rel (%p182) target = $region28
      $region27: #{clip_text_wrapper_forward.8} parent=23 // pred_region
        %p185 = scmp.lt.s32.totalorder %s11, 1
        %s186 = scalar_select %p185, %s11, 1
        %s187 = smul.addr %s186, 4
        %s188 = scalar_lea.vmem %s0, %s187
      $region28: #{clip_text_wrapper_forward.8} parent=23 // pred_fallthru
        _
      // Predicated region
      $region29: #{clip_text_wrapper_forward.8} parent=23 // pred_check
        %p189 = pneg %p57
      $region30: #{clip_text_wrapper_forward.8} parent=23 // pred_check_branch
        %191 = sbr.rel (%p189) target = $region32
      $region31: #{clip_text_wrapper_forward.8} parent=23 // pred_region
        %p192 = scmp.lt.s32.totalorder %s11, 1
        %s193 = scalar_select %p192, %s11, 1
        %s194 = scalar_lea.vmem %s1, %s193
      $region32: #{clip_text_wrapper_forward.8} parent=23 // pred_fallthru
        _
      // Predicated region
      $region33: #{clip_text_wrapper_forward.8} parent=23 // pred_check
        %p195 = pneg %p83
      $region34: #{clip_text_wrapper_forward.8} parent=23 // pred_check_branch
        %197 = sbr.rel (%p195) target = $region36
      $region35: #{clip_text_wrapper_forward.8} parent=23 // pred_region
        %p198 = scmp.lt.s32.totalorder %s11, 1
        %s199 = scalar_select %p198, %s11, 1
        %s200 = smul.addr %s199, 4
        %s201 = scalar_lea.vmem %s2, %s200
      $region36: #{clip_text_wrapper_forward.8} parent=23 // pred_fallthru
        _
    $region24: #{clip_text_wrapper_forward.8} parent=5 // pred_fallthru
      _
    %p202 = scmp.le.s32.totalorder 1, %s11
    %p203 = scmp.lt.s32.totalorder %s11, 3
    %p204 = pnand %p202, %p203
    %p205 = pneg %p204
    // Predicated region
    $region37: #{clip_text_wrapper_forward.8} parent=5 // pred_check
      _
    $region38: #{clip_text_wrapper_forward.8} parent=5 // pred_check_branch
      %207 = sbr.rel (%p204) target = $region40
    $region39: #{clip_text_wrapper_forward.8} parent=5 // pred_region
      %s208 = ssub.s32 %s11, 1
      %p209 = scmp.lt.s32.totalorder %s16, 1
      %s210 = scalar_select %p209, %s16, 1
      %s211 = smul.addr %s210, 4
      %s212 = scalar_lea.vmem %s0, %s211
      %p213 = pneg %p37
      %p214 = pneg %p34
      %p215 = scmp.lt.s32.totalorder %s16, 1
      %s216 = scalar_select %p215, %s16, 1
      %s217 = scalar_lea.vmem %s1, %s216
      %p218 = pneg %p63
      %p219 = pneg %p60
      %p220 = scmp.lt.s32.totalorder %s16, 1
      %s221 = scalar_select %p220, %s16, 1
      %s222 = smul.addr %s221, 4
      %s223 = scalar_lea.vmem %s2, %s222
      %p224 = pneg %p89
      %p225 = pneg %p86
      %p226 = pneg %p110
      %p227 = pneg %p107
      %p228 = pneg %p131
      %p229 = pneg %p128
      %p230 = pneg %p157
      %p231 = pneg %p154
      %p232 = scmp.lt.s32.totalorder %s16, 1
      %s233 = scalar_select %p232, %s16, 1
      %s234 = smul.addr %s233, 4
      %s235 = scalar_lea.vmem %s5, %s234
      %p236 = scmp.lt.s32.totalorder %s16, 1
      %s237 = scalar_select %p236, %s16, 1
      %s238 = smul.addr %s237, 4
      %s239 = scalar_lea.vmem %s0, %s238
      %p240 = scmp.lt.s32.totalorder %s16, 1
      %s241 = scalar_select %p240, %s16, 1
      %s242 = scalar_lea.vmem %s1, %s241
      %p243 = scmp.lt.s32.totalorder %s16, 1
      %s244 = scalar_select %p243, %s16, 1
      %s245 = smul.addr %s244, 4
      %s246 = scalar_lea.vmem %s2, %s245
      %p247 = scmp.lt.s32.totalorder %s16, 1
      %s248 = scalar_select %p247, %s16, 1
      %s249 = smul.addr %s248, 4
      %s250 = scalar_lea.vmem %s5, %s249
      %v252 = vld [vmem:[%s239] sm:$0xf]
      %v253 = vlaneseq
      %v254 = vshrl.u32 %v253, 7
      %v255 = vlaneseq
      %v256 = vand.u32 %v255, 127
      %vm257 = vcmp.le.s32.totalorder %v256, %v254
      %v258 = vld [vmem:[%s242] sm:$0x1]
      %vm259 = vcmp.gt.s32.totalorder %v258, 0
      %v260 = vsel %vm259, 1, 0
      %v261 = vlaneseq
      %v262 = vshrl.u32 %v261, 7
      %v263 = vsub.s32 0, %v262
      %v264 = vrot.slane %v260, %v263
      %vm265 = vcmp.eq.s32.totalorder %v264, 1
      %vm266 = vmand %vm257, %vm265
      %v267 = vsel %vm266, 0.0, -1e+09
      %269 = vrot.lane.b32.xlu0 %v252, 120
      %v270 = vpop.permute.xlu0 %269
      %271 = vrot.lane.b32.xlu0 %v252, 112
      %v272 = vpop.permute.xlu0 %271
      %273 = vrot.lane.b32.xlu0 %v252, 104
      %v274 = vpop.permute.xlu0 %273
      %v275 = vunpack.c.l.b16 %v252
      %v276 = vpack.c.b16 %v275, %v275
      %277 = vrot.lane.b32.xlu0 %v276, 96
      %v278 = vpop.permute.xlu0 %277
      %vm279 = vcmask 64512
      %v281 = vsel %vm279, %v252, 0
      %v284 = vsel %vm279, %v278, 0
      %286 = vmatprep.subr.bf16.mxu0 0
      %287 = vmatpush1.bf16.xpose.msra.mxu0 0
      %288 = vmatprep.subr.bf16.mxu0 0
      %289 = vmatpush1.bf16.xpose.msra.mxu0 0
      %290 = vmatprep.subr.bf16.mxu0 0
      %291 = vmatpush1.bf16.xpose.msra.mxu0 0
      %292 = vmatprep.subr.bf16.mxu0 0
      %293 = vmatpush1.bf16.xpose.msra.mxu0 0
      %294 = vmatprep.subr.bf16.mxu0 0
      %295 = vmatpush1.bf16.xpose.msra.mxu0 0
      %296 = vmatprep.subr.bf16.mxu0 0
      %297 = vmatpush1.bf16.xpose.msra.mxu0 0
      %298 = vmatprep.subr.bf16.mxu0 0
      %299 = vmatpush1.bf16.xpose.msra.mxu0 0
      %300 = vmatprep.subr.bf16.mxu0 0
      %301 = vmatpush1.bf16.xpose.msra.mxu0 %v284
      %302 = vmatprep.subr.bf16.mxu0 0
      %303 = vmatpush2.bf16.xpose.msra.mxu0 0
      %304 = vmatprep.subr.bf16.mxu0 0
      %305 = vmatpush2.bf16.xpose.msra.mxu0 0
      %306 = vmatprep.subr.bf16.mxu0 0
      %307 = vmatpush2.bf16.xpose.msra.mxu0 0
      %308 = vmatprep.subr.bf16.mxu0 0
      %309 = vmatpush2.bf16.xpose.msra.mxu0 0
      %310 = vmatprep.subr.bf16.mxu0 0
      %311 = vmatpush2.bf16.xpose.msra.mxu0 0
      %312 = vmatprep.subr.bf16.mxu0 0
      %313 = vmatpush2.bf16.xpose.msra.mxu0 0
      %314 = vmatprep.subr.bf16.mxu0 0
      %315 = vmatpush2.bf16.xpose.msra.mxu0 0
      %316 = vmatprep.subr.bf16.mxu0 0
      %317 = vmatpush2.bf16.xpose.msra.mxu0 0
      %318 = vmatprep.mubr.bf16.mxu0 0
      %319 = vmatmul.mubr.bf16.gmra.mxu0 %v281
      %v320 = vpop.f32.mrf.mxu0
      %v321 = vadd.f32 %v267, %v320
      %v322 = vpop.f32.mrf.mxu0
      %v323 = vpop.f32.mrf.mxu0
      %v324 = vpop.f32.mrf.mxu0
      %325 = vdwg.mxu0
      %v326 = vunpack.c.l.b16 %v270
      %v327 = vpack.c.b16 %v326, %v326
      %328 = vrot.lane.b32.xlu0 %v327, 96
      %v329 = vpop.permute.xlu0 %328
      %v331 = vsel %vm279, %v270, 0
      %v334 = vsel %vm279, %v329, 0
      %336 = vmatprep.subr.bf16.mxu0 0
      %337 = vmatpush1.bf16.xpose.msra.mxu0 0
      %338 = vmatprep.subr.bf16.mxu0 0
      %339 = vmatpush1.bf16.xpose.msra.mxu0 0
      %340 = vmatprep.subr.bf16.mxu0 0
      %341 = vmatpush1.bf16.xpose.msra.mxu0 0
      %342 = vmatprep.subr.bf16.mxu0 0
      %343 = vmatpush1.bf16.xpose.msra.mxu0 0
      %344 = vmatprep.subr.bf16.mxu0 0
      %345 = vmatpush1.bf16.xpose.msra.mxu0 0
      %346 = vmatprep.subr.bf16.mxu0 0
      %347 = vmatpush1.bf16.xpose.msra.mxu0 0
      %348 = vmatprep.subr.bf16.mxu0 0
      %349 = vmatpush1.bf16.xpose.msra.mxu0 0
      %350 = vmatprep.subr.bf16.mxu0 0
      %351 = vmatpush1.bf16.xpose.msra.mxu0 %v334
      %352 = vmatprep.subr.bf16.mxu0 0
      %353 = vmatpush2.bf16.xpose.msra.mxu0 0
      %354 = vmatprep.subr.bf16.mxu0 0
      %355 = vmatpush2.bf16.xpose.msra.mxu0 0
      %356 = vmatprep.subr.bf16.mxu0 0
      %357 = vmatpush2.bf16.xpose.msra.mxu0 0
      %358 = vmatprep.subr.bf16.mxu0 0
      %359 = vmatpush2.bf16.xpose.msra.mxu0 0
      %360 = vmatprep.subr.bf16.mxu0 0
      %361 = vmatpush2.bf16.xpose.msra.mxu0 0
      %362 = vmatprep.subr.bf16.mxu0 0
      %363 = vmatpush2.bf16.xpose.msra.mxu0 0
      %364 = vmatprep.subr.bf16.mxu0 0
      %365 = vmatpush2.bf16.xpose.msra.mxu0 0
      %366 = vmatprep.subr.bf16.mxu0 0
      %367 = vmatpush2.bf16.xpose.msra.mxu0 0
      %368 = vmatprep.mubr.bf16.mxu0 0
      %369 = vmatmul.mubr.bf16.gmra.mxu0 %v331
      %v370 = vpop.f32.mrf.mxu0
      %v371 = vadd.f32 %v267, %v370
      %v372 = vpop.f32.mrf.mxu0
      %v373 = vpop.f32.mrf.mxu0
      %v374 = vpop.f32.mrf.mxu0
      %375 = vdwg.mxu0
      %v376 = vunpack.c.l.b16 %v272
      %v377 = vpack.c.b16 %v376, %v376
      %378 = vrot.lane.b32.xlu0 %v377, 96
      %v379 = vpop.permute.xlu0 %378
      %v381 = vsel %vm279, %v272, 0
      %v384 = vsel %vm279, %v379, 0
      %386 = vmatprep.subr.bf16.mxu0 0
      %387 = vmatpush1.bf16.xpose.msra.mxu0 0
      %388 = vmatprep.subr.bf16.mxu0 0
      %389 = vmatpush1.bf16.xpose.msra.mxu0 0
      %390 = vmatprep.subr.bf16.mxu0 0
      %391 = vmatpush1.bf16.xpose.msra.mxu0 0
      %392 = vmatprep.subr.bf16.mxu0 0
      %393 = vmatpush1.bf16.xpose.msra.mxu0 0
      %394 = vmatprep.subr.bf16.mxu0 0
      %395 = vmatpush1.bf16.xpose.msra.mxu0 0
      %396 = vmatprep.subr.bf16.mxu0 0
      %397 = vmatpush1.bf16.xpose.msra.mxu0 0
      %398 = vmatprep.subr.bf16.mxu0 0
      %399 = vmatpush1.bf16.xpose.msra.mxu0 0
      %400 = vmatprep.subr.bf16.mxu0 0
      %401 = vmatpush1.bf16.xpose.msra.mxu0 %v384
      %402 = vmatprep.subr.bf16.mxu0 0
      %403 = vmatpush2.bf16.xpose.msra.mxu0 0
      %404 = vmatprep.subr.bf16.mxu0 0
      %405 = vmatpush2.bf16.xpose.msra.mxu0 0
      %406 = vmatprep.subr.bf16.mxu0 0
      %407 = vmatpush2.bf16.xpose.msra.mxu0 0
      %408 = vmatprep.subr.bf16.mxu0 0
      %409 = vmatpush2.bf16.xpose.msra.mxu0 0
      %410 = vmatprep.subr.bf16.mxu0 0
      %411 = vmatpush2.bf16.xpose.msra.mxu0 0
      %412 = vmatprep.subr.bf16.mxu0 0
      %413 = vmatpush2.bf16.xpose.msra.mxu0 0
      %414 = vmatprep.subr.bf16.mxu0 0
      %415 = vmatpush2.bf16.xpose.msra.mxu0 0
      %416 = vmatprep.subr.bf16.mxu0 0
      %417 = vmatpush2.bf16.xpose.msra.mxu0 0
      %418 = vmatprep.mubr.bf16.mxu0 0
      %419 = vmatmul.mubr.bf16.gmra.mxu0 %v381
      %v420 = vpop.f32.mrf.mxu0
      %v421 = vadd.f32 %v267, %v420
      %v422 = vpop.f32.mrf.mxu0
      %v423 = vpop.f32.mrf.mxu0
      %v424 = vpop.f32.mrf.mxu0
      %425 = vdwg.mxu0
      %v426 = vunpack.c.l.b16 %v274
      %v427 = vpack.c.b16 %v426, %v426
      %428 = vrot.lane.b32.xlu0 %v427, 96
      %v429 = vpop.permute.xlu0 %428
      %v431 = vsel %vm279, %v274, 0
      %v434 = vsel %vm279, %v429, 0
      %436 = vmatprep.subr.bf16.mxu0 0
      %437 = vmatpush1.bf16.xpose.msra.mxu0 0
      %438 = vmatprep.subr.bf16.mxu0 0
      %439 = vmatpush1.bf16.xpose.msra.mxu0 0
      %440 = vmatprep.subr.bf16.mxu0 0
      %441 = vmatpush1.bf16.xpose.msra.mxu0 0
      %442 = vmatprep.subr.bf16.mxu0 0
      %443 = vmatpush1.bf16.xpose.msra.mxu0 0
      %444 = vmatprep.subr.bf16.mxu0 0
      %445 = vmatpush1.bf16.xpose.msra.mxu0 0
      %446 = vmatprep.subr.bf16.mxu0 0
      %447 = vmatpush1.bf16.xpose.msra.mxu0 0
      %448 = vmatprep.subr.bf16.mxu0 0
      %449 = vmatpush1.bf16.xpose.msra.mxu0 0
      %450 = vmatprep.subr.bf16.mxu0 0
      %451 = vmatpush1.bf16.xpose.msra.mxu0 %v434
      %452 = vmatprep.subr.bf16.mxu0 0
      %453 = vmatpush2.bf16.xpose.msra.mxu0 0
      %454 = vmatprep.subr.bf16.mxu0 0
      %455 = vmatpush2.bf16.xpose.msra.mxu0 0
      %456 = vmatprep.subr.bf16.mxu0 0
      %457 = vmatpush2.bf16.xpose.msra.mxu0 0
      %458 = vmatprep.subr.bf16.mxu0 0
      %459 = vmatpush2.bf16.xpose.msra.mxu0 0
      %460 = vmatprep.subr.bf16.mxu0 0
      %461 = vmatpush2.bf16.xpose.msra.mxu0 0
      %462 = vmatprep.subr.bf16.mxu0 0
      %463 = vmatpush2.bf16.xpose.msra.mxu0 0
      %464 = vmatprep.subr.bf16.mxu0 0
      %465 = vmatpush2.bf16.xpose.msra.mxu0 0
      %466 = vmatprep.subr.bf16.mxu0 0
      %467 = vmatpush2.bf16.xpose.msra.mxu0 0
      %468 = vmatprep.mubr.bf16.mxu0 0
      %469 = vmatmul.mubr.bf16.gmra.mxu0 %v431
      %v470 = vpop.f32.mrf.mxu0
      %v471 = vadd.f32 %v267, %v470
      %v472 = vpop.f32.mrf.mxu0
      %v473 = vpop.f32.mrf.mxu0
      %v474 = vpop.f32.mrf.mxu0
      %475 = vdwg.mxu0
      %v476 = vsel %vm279, %v321, -inf
      %477 = vmax.xlane.f32.xlu0 %v476
      %v478 = vpop.xlane.xlu0 %477
      %v479 = vsel %vm279, %v371, -inf
      %480 = vmax.xlane.f32.xlu0 %v479
      %v481 = vpop.xlane.xlu0 %480
      %v482 = vsel %vm279, %v421, -inf
      %483 = vmax.xlane.f32.xlu0 %v482
      %v484 = vpop.xlane.xlu0 %483
      %v485 = vsel %vm279, %v471, -inf
      %486 = vmax.xlane.f32.xlu0 %v485
      %v487 = vpop.xlane.xlu0 %486
      %v488 = vsub.f32 %v321, %v478
      %v489 = vsub.f32 %v371, %v481
      %v490 = vsub.f32 %v421, %v484
      %v491 = vsub.f32 %v471, %v487
      %v492 = vmul.f32 %v488, 1.442695
      %v493 = vpow.pop %v492
      %v494 = vmul.f32 %v489, 1.442695
      %v495 = vpow.pop %v494
      %v496 = vmul.f32 %v490, 1.442695
      %v497 = vpow.pop %v496
      %v498 = vmul.f32 %v491, 1.442695
      %v499 = vpow.pop %v498
      %v500 = vsel %vm279, %v493, 0.0
      %501 = vadd.xlane.f32.xlu0 %v500
      %v502 = vpop.xlane.xlu0 %501
      %v503 = vsel %vm279, %v495, 0.0
      %504 = vadd.xlane.f32.xlu0 %v503
      %v505 = vpop.xlane.xlu0 %504
      %v506 = vsel %vm279, %v497, 0.0
      %507 = vadd.xlane.f32.xlu0 %v506
      %v508 = vpop.xlane.xlu0 %507
      %v509 = vsel %vm279, %v499, 0.0
      %510 = vadd.xlane.f32.xlu0 %v509
      %v511 = vpop.xlane.xlu0 %510
      %v512 = vrcp.pop %v502
      %v513 = vrcp.pop %v505
      %v514 = vrcp.pop %v508
      %v515 = vrcp.pop %v511
      %v516 = vmul.f32 %v493, %v512
      %v517 = vmul.f32 %v495, %v513
      %v518 = vmul.f32 %v497, %v514
      %v519 = vmul.f32 %v499, %v515
      %v520 = vpack.c.bf16 %v516, %v516
      %v521 = vpack.c.bf16 %v517, %v517
      %v522 = vpack.c.bf16 %v518, %v518
      %v523 = vpack.c.bf16 %v519, %v519
      %524 = vrot.lane.b32.xlu0 %v276, 64
      %v525 = vpop.permute.xlu0 %524
      %v527 = vsel %vm279, %v520, 0
      %vm529 = vcmask 1043456
      %v531 = vsel %vm529, %v525, 0
      %533 = vmatprep.subr.bf16.mxu0 0
      %534 = vmatpush1.bf16.msra.mxu0 0
      %535 = vmatprep.subr.bf16.mxu0 0
      %536 = vmatpush1.bf16.msra.mxu0 0
      %537 = vmatprep.subr.bf16.mxu0 0
      %538 = vmatpush1.bf16.msra.mxu0 0
      %539 = vmatprep.subr.bf16.mxu0 0
      %540 = vmatpush1.bf16.msra.mxu0 0
      %541 = vmatprep.subr.bf16.mxu0 0
      %542 = vmatpush1.bf16.msra.mxu0 0
      %543 = vmatprep.subr.bf16.mxu0 0
      %544 = vmatpush1.bf16.msra.mxu0 0
      %545 = vmatprep.subr.bf16.mxu0 0
      %546 = vmatpush1.bf16.msra.mxu0 0
      %547 = vmatprep.subr.bf16.mxu0 0
      %548 = vmatpush1.bf16.msra.mxu0 %v531
      %549 = vmatprep.subr.bf16.mxu0 0
      %550 = vmatpush2.bf16.msra.mxu0 0
      %551 = vmatprep.subr.bf16.mxu0 0
      %552 = vmatpush2.bf16.msra.mxu0 0
      %553 = vmatprep.subr.bf16.mxu0 0
      %554 = vmatpush2.bf16.msra.mxu0 0
      %555 = vmatprep.subr.bf16.mxu0 0
      %556 = vmatpush2.bf16.msra.mxu0 0
      %557 = vmatprep.subr.bf16.mxu0 0
      %558 = vmatpush2.bf16.msra.mxu0 0
      %559 = vmatprep.subr.bf16.mxu0 0
      %560 = vmatpush2.bf16.msra.mxu0 0
      %561 = vmatprep.subr.bf16.mxu0 0
      %562 = vmatpush2.bf16.msra.mxu0 0
      %563 = vmatprep.subr.bf16.mxu0 0
      %564 = vmatpush2.bf16.msra.mxu0 0
      %565 = vmatprep.mubr.bf16.mxu0 0
      %566 = vmatmul.mubr.bf16.gmra.mxu0 %v527
      %v567 = vpop.f32.mrf.mxu0
      %v568 = vadd.f32 0.0, %v567
      %v569 = vpop.f32.mrf.mxu0
      %v570 = vpop.f32.mrf.mxu0
      %v571 = vpop.f32.mrf.mxu0
      %572 = vdwg.mxu0
      %573 = vrot.lane.b32.xlu0 %v327, 64
      %v574 = vpop.permute.xlu0 %573
      %v576 = vsel %vm279, %v521, 0
      %v579 = vsel %vm529, %v574, 0
      %581 = vmatprep.subr.bf16.mxu0 0
      %582 = vmatpush1.bf16.msra.mxu0 0
      %583 = vmatprep.subr.bf16.mxu0 0
      %584 = vmatpush1.bf16.msra.mxu0 0
      %585 = vmatprep.subr.bf16.mxu0 0
      %586 = vmatpush1.bf16.msra.mxu0 0
      %587 = vmatprep.subr.bf16.mxu0 0
      %588 = vmatpush1.bf16.msra.mxu0 0
      %589 = vmatprep.subr.bf16.mxu0 0
      %590 = vmatpush1.bf16.msra.mxu0 0
      %591 = vmatprep.subr.bf16.mxu0 0
      %592 = vmatpush1.bf16.msra.mxu0 0
      %593 = vmatprep.subr.bf16.mxu0 0
      %594 = vmatpush1.bf16.msra.mxu0 0
      %595 = vmatprep.subr.bf16.mxu0 0
      %596 = vmatpush1.bf16.msra.mxu0 %v579
      %597 = vmatprep.subr.bf16.mxu0 0
      %598 = vmatpush2.bf16.msra.mxu0 0
      %599 = vmatprep.subr.bf16.mxu0 0
      %600 = vmatpush2.bf16.msra.mxu0 0
      %601 = vmatprep.subr.bf16.mxu0 0
      %602 = vmatpush2.bf16.msra.mxu0 0
      %603 = vmatprep.subr.bf16.mxu0 0
      %604 = vmatpush2.bf16.msra.mxu0 0
      %605 = vmatprep.subr.bf16.mxu0 0
      %606 = vmatpush2.bf16.msra.mxu0 0
      %607 = vmatprep.subr.bf16.mxu0 0
      %608 = vmatpush2.bf16.msra.mxu0 0
      %609 = vmatprep.subr.bf16.mxu0 0
      %610 = vmatpush2.bf16.msra.mxu0 0
      %611 = vmatprep.subr.bf16.mxu0 0
      %612 = vmatpush2.bf16.msra.mxu0 0
      %613 = vmatprep.mubr.bf16.mxu0 0
      %614 = vmatmul.mubr.bf16.gmra.mxu0 %v576
      %v615 = vpop.f32.mrf.mxu0
      %v616 = vadd.f32 0.0, %v615
      %v617 = vpop.f32.mrf.mxu0
      %v618 = vpop.f32.mrf.mxu0
      %v619 = vpop.f32.mrf.mxu0
      %620 = vdwg.mxu0
      %621 = vrot.lane.b32.xlu0 %v377, 64
      %v622 = vpop.permute.xlu0 %621
      %v624 = vsel %vm279, %v522, 0
      %v627 = vsel %vm529, %v622, 0
      %629 = vmatprep.subr.bf16.mxu0 0
      %630 = vmatpush1.bf16.msra.mxu0 0
      %631 = vmatprep.subr.bf16.mxu0 0
      %632 = vmatpush1.bf16.msra.mxu0 0
      %633 = vmatprep.subr.bf16.mxu0 0
      %634 = vmatpush1.bf16.msra.mxu0 0
      %635 = vmatprep.subr.bf16.mxu0 0
      %636 = vmatpush1.bf16.msra.mxu0 0
      %637 = vmatprep.subr.bf16.mxu0 0
      %638 = vmatpush1.bf16.msra.mxu0 0
      %639 = vmatprep.subr.bf16.mxu0 0
      %640 = vmatpush1.bf16.msra.mxu0 0
      %641 = vmatprep.subr.bf16.mxu0 0
      %642 = vmatpush1.bf16.msra.mxu0 0
      %643 = vmatprep.subr.bf16.mxu0 0
      %644 = vmatpush1.bf16.msra.mxu0 %v627
      %645 = vmatprep.subr.bf16.mxu0 0
      %646 = vmatpush2.bf16.msra.mxu0 0
      %647 = vmatprep.subr.bf16.mxu0 0
      %648 = vmatpush2.bf16.msra.mxu0 0
      %649 = vmatprep.subr.bf16.mxu0 0
      %650 = vmatpush2.bf16.msra.mxu0 0
      %651 = vmatprep.subr.bf16.mxu0 0
      %652 = vmatpush2.bf16.msra.mxu0 0
      %653 = vmatprep.subr.bf16.mxu0 0
      %654 = vmatpush2.bf16.msra.mxu0 0
      %655 = vmatprep.subr.bf16.mxu0 0
      %656 = vmatpush2.bf16.msra.mxu0 0
      %657 = vmatprep.subr.bf16.mxu0 0
      %658 = vmatpush2.bf16.msra.mxu0 0
      %659 = vmatprep.subr.bf16.mxu0 0
      %660 = vmatpush2.bf16.msra.mxu0 0
      %661 = vmatprep.mubr.bf16.mxu0 0
      %662 = vmatmul.mubr.bf16.gmra.mxu0 %v624
      %v663 = vpop.f32.mrf.mxu0
      %v664 = vadd.f32 0.0, %v663
      %v665 = vpop.f32.mrf.mxu0
      %v666 = vpop.f32.mrf.mxu0
      %v667 = vpop.f32.mrf.mxu0
      %668 = vdwg.mxu0
      %669 = vrot.lane.b32.xlu0 %v427, 64
      %v670 = vpop.permute.xlu0 %669
      %v672 = vsel %vm279, %v523, 0
      %v675 = vsel %vm529, %v670, 0
      %677 = vmatprep.subr.bf16.mxu0 0
      %678 = vmatpush1.bf16.msra.mxu0 0
      %679 = vmatprep.subr.bf16.mxu0 0
      %680 = vmatpush1.bf16.msra.mxu0 0
      %681 = vmatprep.subr.bf16.mxu0 0
      %682 = vmatpush1.bf16.msra.mxu0 0
      %683 = vmatprep.subr.bf16.mxu0 0
      %684 = vmatpush1.bf16.msra.mxu0 0
      %685 = vmatprep.subr.bf16.mxu0 0
      %686 = vmatpush1.bf16.msra.mxu0 0
      %687 = vmatprep.subr.bf16.mxu0 0
      %688 = vmatpush1.bf16.msra.mxu0 0
      %689 = vmatprep.subr.bf16.mxu0 0
      %690 = vmatpush1.bf16.msra.mxu0 0
      %691 = vmatprep.subr.bf16.mxu0 0
      %692 = vmatpush1.bf16.msra.mxu0 %v675
      %693 = vmatprep.subr.bf16.mxu0 0
      %694 = vmatpush2.bf16.msra.mxu0 0
      %695 = vmatprep.subr.bf16.mxu0 0
      %696 = vmatpush2.bf16.msra.mxu0 0
      %697 = vmatprep.subr.bf16.mxu0 0
      %698 = vmatpush2.bf16.msra.mxu0 0
      %699 = vmatprep.subr.bf16.mxu0 0
      %700 = vmatpush2.bf16.msra.mxu0 0
      %701 = vmatprep.subr.bf16.mxu0 0
      %702 = vmatpush2.bf16.msra.mxu0 0
      %703 = vmatprep.subr.bf16.mxu0 0
      %704 = vmatpush2.bf16.msra.mxu0 0
      %705 = vmatprep.subr.bf16.mxu0 0
      %706 = vmatpush2.bf16.msra.mxu0 0
      %707 = vmatprep.subr.bf16.mxu0 0
      %708 = vmatpush2.bf16.msra.mxu0 0
      %709 = vmatprep.mubr.bf16.mxu0 0
      %710 = vmatmul.mubr.bf16.gmra.mxu0 %v672
      %v711 = vpop.f32.mrf.mxu0
      %v712 = vadd.f32 0.0, %v711
      %v713 = vpop.f32.mrf.mxu0
      %v714 = vpop.f32.mrf.mxu0
      %v715 = vpop.f32.mrf.mxu0
      %716 = vdwg.mxu0
      %v717 = vpack.c.bf16 %v568, %v568
      %v718 = vpack.c.bf16 %v616, %v616
      %v719 = vpack.c.bf16 %v664, %v664
      %v720 = vpack.c.bf16 %v712, %v712
      %v721 = vld [vmem:[%s3] sm:$0xf]
      %v722 = vld [vmem:[%s3 + $0x4] sm:$0xf]
      %v723 = vld [vmem:[%s3 + $0x8] sm:$0xf]
      %v724 = vld [vmem:[%s3 + $0xc] sm:$0xf]
      %v726 = vsel %vm279, %v717, 0
      %v729 = vsel %vm529, %v721, 0
      %731 = vmatprep.subr.bf16.mxu0 0
      %732 = vmatpush1.bf16.msra.mxu0 0
      %733 = vmatprep.subr.bf16.mxu0 0
      %734 = vmatpush1.bf16.msra.mxu0 0
      %735 = vmatprep.subr.bf16.mxu0 0
      %736 = vmatpush1.bf16.msra.mxu0 0
      %737 = vmatprep.subr.bf16.mxu0 0
      %738 = vmatpush1.bf16.msra.mxu0 0
      %739 = vmatprep.subr.bf16.mxu0 0
      %740 = vmatpush1.bf16.msra.mxu0 0
      %741 = vmatprep.subr.bf16.mxu0 0
      %742 = vmatpush1.bf16.msra.mxu0 0
      %743 = vmatprep.subr.bf16.mxu0 0
      %744 = vmatpush1.bf16.msra.mxu0 0
      %745 = vmatprep.subr.bf16.mxu0 0
      %746 = vmatpush1.bf16.msra.mxu0 %v729
      %747 = vmatprep.subr.bf16.mxu0 0
      %748 = vmatpush2.bf16.msra.mxu0 0
      %749 = vmatprep.subr.bf16.mxu0 0
      %750 = vmatpush2.bf16.msra.mxu0 0
      %751 = vmatprep.subr.bf16.mxu0 0
      %752 = vmatpush2.bf16.msra.mxu0 0
      %753 = vmatprep.subr.bf16.mxu0 0
      %754 = vmatpush2.bf16.msra.mxu0 0
      %755 = vmatprep.subr.bf16.mxu0 0
      %756 = vmatpush2.bf16.msra.mxu0 0
      %757 = vmatprep.subr.bf16.mxu0 0
      %758 = vmatpush2.bf16.msra.mxu0 0
      %759 = vmatprep.subr.bf16.mxu0 0
      %760 = vmatpush2.bf16.msra.mxu0 0
      %761 = vmatprep.subr.bf16.mxu0 0
      %762 = vmatpush2.bf16.msra.mxu0 0
      %763 = vmatprep.mubr.bf16.mxu0 0
      %764 = vmatmul.mubr.bf16.gmra.mxu0 %v726
      %v765 = vpop.f32.mrf.mxu0
      %v766 = vadd.f32 0.0, %v765
      %v767 = vpop.f32.mrf.mxu0
      %v768 = vpop.f32.mrf.mxu0
      %v769 = vpop.f32.mrf.mxu0
      %770 = vdwg.mxu0
      %v772 = vsel %vm279, %v718, 0
      %v775 = vsel %vm529, %v722, 0
      %777 = vmatprep.subr.bf16.mxu0 0
      %778 = vmatpush1.bf16.msra.mxu0 0
      %779 = vmatprep.subr.bf16.mxu0 0
      %780 = vmatpush1.bf16.msra.mxu0 0
      %781 = vmatprep.subr.bf16.mxu0 0
      %782 = vmatpush1.bf16.msra.mxu0 0
      %783 = vmatprep.subr.bf16.mxu0 0
      %784 = vmatpush1.bf16.msra.mxu0 0
      %785 = vmatprep.subr.bf16.mxu0 0
      %786 = vmatpush1.bf16.msra.mxu0 0
      %787 = vmatprep.subr.bf16.mxu0 0
      %788 = vmatpush1.bf16.msra.mxu0 0
      %789 = vmatprep.subr.bf16.mxu0 0
      %790 = vmatpush1.bf16.msra.mxu0 0
      %791 = vmatprep.subr.bf16.mxu0 0
      %792 = vmatpush1.bf16.msra.mxu0 %v775
      %793 = vmatprep.subr.bf16.mxu0 0
      %794 = vmatpush2.bf16.msra.mxu0 0
      %795 = vmatprep.subr.bf16.mxu0 0
      %796 = vmatpush2.bf16.msra.mxu0 0
      %797 = vmatprep.subr.bf16.mxu0 0
      %798 = vmatpush2.bf16.msra.mxu0 0
      %799 = vmatprep.subr.bf16.mxu0 0
      %800 = vmatpush2.bf16.msra.mxu0 0
      %801 = vmatprep.subr.bf16.mxu0 0
      %802 = vmatpush2.bf16.msra.mxu0 0
      %803 = vmatprep.subr.bf16.mxu0 0
      %804 = vmatpush2.bf16.msra.mxu0 0
      %805 = vmatprep.subr.bf16.mxu0 0
      %806 = vmatpush2.bf16.msra.mxu0 0
      %807 = vmatprep.subr.bf16.mxu0 0
      %808 = vmatpush2.bf16.msra.mxu0 0
      %809 = vmatprep.mubr.bf16.mxu0 0
      %810 = vmatmul.mubr.bf16.gmra.mxu0 %v772
      %v811 = vpop.f32.mrf.mxu0
      %v812 = vadd.f32 0.0, %v811
      %v813 = vpop.f32.mrf.mxu0
      %v814 = vpop.f32.mrf.mxu0
      %v815 = vpop.f32.mrf.mxu0
      %816 = vdwg.mxu0
      %v818 = vsel %vm279, %v719, 0
      %v821 = vsel %vm529, %v723, 0
      %823 = vmatprep.subr.bf16.mxu0 0
      %824 = vmatpush1.bf16.msra.mxu0 0
      %825 = vmatprep.subr.bf16.mxu0 0
      %826 = vmatpush1.bf16.msra.mxu0 0
      %827 = vmatprep.subr.bf16.mxu0 0
      %828 = vmatpush1.bf16.msra.mxu0 0
      %829 = vmatprep.subr.bf16.mxu0 0
      %830 = vmatpush1.bf16.msra.mxu0 0
      %831 = vmatprep.subr.bf16.mxu0 0
      %832 = vmatpush1.bf16.msra.mxu0 0
      %833 = vmatprep.subr.bf16.mxu0 0
      %834 = vmatpush1.bf16.msra.mxu0 0
      %835 = vmatprep.subr.bf16.mxu0 0
      %836 = vmatpush1.bf16.msra.mxu0 0
      %837 = vmatprep.subr.bf16.mxu0 0
      %838 = vmatpush1.bf16.msra.mxu0 %v821
      %839 = vmatprep.subr.bf16.mxu0 0
      %840 = vmatpush2.bf16.msra.mxu0 0
      %841 = vmatprep.subr.bf16.mxu0 0
      %842 = vmatpush2.bf16.msra.mxu0 0
      %843 = vmatprep.subr.bf16.mxu0 0
      %844 = vmatpush2.bf16.msra.mxu0 0
      %845 = vmatprep.subr.bf16.mxu0 0
      %846 = vmatpush2.bf16.msra.mxu0 0
      %847 = vmatprep.subr.bf16.mxu0 0
      %848 = vmatpush2.bf16.msra.mxu0 0
      %849 = vmatprep.subr.bf16.mxu0 0
      %850 = vmatpush2.bf16.msra.mxu0 0
      %851 = vmatprep.subr.bf16.mxu0 0
      %852 = vmatpush2.bf16.msra.mxu0 0
      %853 = vmatprep.subr.bf16.mxu0 0
      %854 = vmatpush2.bf16.msra.mxu0 0
      %855 = vmatprep.mubr.bf16.mxu0 0
      %856 = vmatmul.mubr.bf16.gmra.mxu0 %v818
      %v857 = vpop.f32.mrf.mxu0
      %v858 = vadd.f32 0.0, %v857
      %v859 = vpop.f32.mrf.mxu0
      %v860 = vpop.f32.mrf.mxu0
      %v861 = vpop.f32.mrf.mxu0
      %862 = vdwg.mxu0
      %v864 = vsel %vm279, %v720, 0
      %v867 = vsel %vm529, %v724, 0
      %869 = vmatprep.subr.bf16.mxu0 0
      %870 = vmatpush1.bf16.msra.mxu0 0
      %871 = vmatprep.subr.bf16.mxu0 0
      %872 = vmatpush1.bf16.msra.mxu0 0
      %873 = vmatprep.subr.bf16.mxu0 0
      %874 = vmatpush1.bf16.msra.mxu0 0
      %875 = vmatprep.subr.bf16.mxu0 0
      %876 = vmatpush1.bf16.msra.mxu0 0
      %877 = vmatprep.subr.bf16.mxu0 0
      %878 = vmatpush1.bf16.msra.mxu0 0
      %879 = vmatprep.subr.bf16.mxu0 0
      %880 = vmatpush1.bf16.msra.mxu0 0
      %881 = vmatprep.subr.bf16.mxu0 0
      %882 = vmatpush1.bf16.msra.mxu0 0
      %883 = vmatprep.subr.bf16.mxu0 0
      %884 = vmatpush1.bf16.msra.mxu0 %v867
      %885 = vmatprep.subr.bf16.mxu0 0
      %886 = vmatpush2.bf16.msra.mxu0 0
      %887 = vmatprep.subr.bf16.mxu0 0
      %888 = vmatpush2.bf16.msra.mxu0 0
      %889 = vmatprep.subr.bf16.mxu0 0
      %890 = vmatpush2.bf16.msra.mxu0 0
      %891 = vmatprep.subr.bf16.mxu0 0
      %892 = vmatpush2.bf16.msra.mxu0 0
      %893 = vmatprep.subr.bf16.mxu0 0
      %894 = vmatpush2.bf16.msra.mxu0 0
      %895 = vmatprep.subr.bf16.mxu0 0
      %896 = vmatpush2.bf16.msra.mxu0 0
      %897 = vmatprep.subr.bf16.mxu0 0
      %898 = vmatpush2.bf16.msra.mxu0 0
      %899 = vmatprep.subr.bf16.mxu0 0
      %900 = vmatpush2.bf16.msra.mxu0 0
      %901 = vmatprep.mubr.bf16.mxu0 0
      %902 = vmatmul.mubr.bf16.gmra.mxu0 %v864
      %v903 = vpop.f32.mrf.mxu0
      %v904 = vadd.f32 0.0, %v903
      %v905 = vpop.f32.mrf.mxu0
      %v906 = vpop.f32.mrf.mxu0
      %v907 = vpop.f32.mrf.mxu0
      %908 = vdwg.mxu0
      %vm909 = vcmask 261120
      %v910 = vsel %vm909, %v766, 0.0
      %v911 = vsel %vm909, %v812, 0.0
      %v912 = vadd.f32 %v910, %v911
      %v913 = vsel %vm909, %v858, 0.0
      %v914 = vadd.f32 %v912, %v913
      %v915 = vsel %vm909, %v904, 0.0
      %v916 = vadd.f32 %v914, %v915
      %v917 = vld [vmem:[%s4] sm:$0x1]
      %v919 = vlaneseq
      %v920 = vshrl.u32 %v919, 7
      %v921 = vsub.s32 0, %v920
      %v922 = vrot.slane %v917, %v921
      %v924 = vadd.f32 %v916, %v922
      %v925 = vld [vmem:[%s246] sm:$0xf]
      %v926 = vunpack.c.l.bf16 %v925
      %v927 = vadd.f32 %v924, %v926
      %v928 = vpack.c.bf16 %v927, %v927
      %vm929 = vcmask 257024
      %930 = vst.msk [vmem:[%s250] sm:$0xf] %vm929, %v928
      %p931 = scmp.lt.s32.totalorder %s16, 1
      %s932 = scalar_select %p931, %s16, 1
      %s933 = smul.addr %s932, 4
      %s934 = scalar_lea.vmem %s5, %s933
      // Predicated region
      $region41: #{clip_text_wrapper_forward.8} parent=39 // pred_check
        %p935 = pneg %p154
      $region42: #{clip_text_wrapper_forward.8} parent=39 // pred_check_branch
        %937 = sbr.rel (%p935) target = $region44
      $region43: #{clip_text_wrapper_forward.8} parent=39 // pred_region
        _
      $region44: #{clip_text_wrapper_forward.8} parent=39 // pred_fallthru
        _
    $region40: #{clip_text_wrapper_forward.8} parent=5 // pred_fallthru
      _
    %p938 = scmp.le.s32.totalorder 2, %s11
    // Predicated region
    $region45: #{clip_text_wrapper_forward.8} parent=5 // pred_check
      %p939 = pneg %p938
    $region46: #{clip_text_wrapper_forward.8} parent=5 // pred_check_branch
      %941 = sbr.rel (%p939) target = $region48
    $region47: #{clip_text_wrapper_forward.8} parent=5 // pred_region
      %s942 = ssub.s32 %s11, 2
      // Predicated region
      $region49: #{clip_text_wrapper_forward.8} parent=47 // pred_check
        %p943 = pneg %p160
      $region50: #{clip_text_wrapper_forward.8} parent=47 // pred_check_branch
        %945 = sbr.rel (%p943) target = $region52
      $region51: #{clip_text_wrapper_forward.8} parent=47 // pred_region
        %p946 = scmp.lt.s32.totalorder %s17, 1
        %s947 = scalar_select %p946, %s17, 1
        %s948 = smul.addr %s947, 4
        %s949 = scalar_lea.vmem %s5, %s948
      $region52: #{clip_text_wrapper_forward.8} parent=47 // pred_fallthru
        _
    $region48: #{clip_text_wrapper_forward.8} parent=5 // pred_fallthru
      _
  $region6: #{clip_text_wrapper_forward.8} parent=0 // loop_footer
    %s15 = sadd.s32 1, %s11
  $region7: #{clip_text_wrapper_forward.8} parent=0 // loop_footer_branch
    %10 = sbr.rel target = $region3
  $region8: #{clip_text_wrapper_forward.8} parent=0 // loop_exit
    _

// kernel: clip_text_wrapper_forward.13
$region0: #{clip_text_wrapper_forward.13}
  #allocation0 [shape = 'u32[]', space=smem, size = 0x4, offset = 0x4, fixed_abs, tag = 'smem constant byte address 0x4 - core index']
  #allocation1 [shape = 'u32[144,128]{1,0:T(1,128)}', space=vmem, size = 0x12000, scoped, tag = 'internal scratch']
  %s0 = inlined_call_operand.vmem [shape: bf16[2,32], index: 0, kind: input, shape index: {}]
  %s1 = inlined_call_operand.vmem [shape: f32[1,32], index: 1, kind: input, shape index: {}]
  %s2 = inlined_call_operand.vmem [shape: f32[1,32], index: 2, kind: input, shape index: {}]
  %s3 = inlined_call_operand.vmem [shape: bf16[32,16], index: 3, kind: input, shape index: {}]
  %s4 = inlined_call_operand.hbm [shape: f32[2,16], index: 4, kind: output, shape index: {}]
  %s5 = sld [smem:[#allocation0]]
  $region26: #{clip_text_wrapper_forward.13} parent=0
    _
  %s7 = ssub.s32 1, %s5
  %s8 = scalar_select 0, %s7, %s5
  $region1: #{clip_text_wrapper_forward.13} parent=0
    #allocation2 [shape = 'u8[1024]{0}', space=vmem, size = 0x400, scoped, tag = 'output window, operand 0, single buffered']
    #allocation3 [shape = 's32[1]{0}', space=sflag, size = 0x4, scoped, tag = 'scoped memory for clip_text_wrapper_forward.13']
    %9 = vsyncpa [#allocation3], 0
    // Predicated region
    $region2: #{clip_text_wrapper_forward.13} parent=1 // pred_check
      _
    $region3: #{clip_text_wrapper_forward.13} parent=1 // pred_check_branch
      %11 = sbr.rel (0) target = $region5
    $region4: #{clip_text_wrapper_forward.13} parent=1 // pred_region
      _
    $region5: #{clip_text_wrapper_forward.13} parent=1 // pred_fallthru
      _
    // Predicated region
    $region6: #{clip_text_wrapper_forward.13} parent=1 // pred_check
      _
    $region7: #{clip_text_wrapper_forward.13} parent=1 // pred_check_branch
      %13 = sbr.rel (0) target = $region9
    $region8: #{clip_text_wrapper_forward.13} parent=1 // pred_region
      _
    $region9: #{clip_text_wrapper_forward.13} parent=1 // pred_fallthru
      _
    // Predicated region
    $region10: #{clip_text_wrapper_forward.13} parent=1 // pred_check
      _
    $region11: #{clip_text_wrapper_forward.13} parent=1 // pred_check_branch
      %15 = sbr.rel (0) target = $region13
    $region12: #{clip_text_wrapper_forward.13} parent=1 // pred_region
      _
    $region13: #{clip_text_wrapper_forward.13} parent=1 // pred_fallthru
      _
    // Predicated region
    $region14: #{clip_text_wrapper_forward.13} parent=1 // pred_check
      _
    $region15: #{clip_text_wrapper_forward.13} parent=1 // pred_check_branch
      %17 = sbr.rel (0) target = $region17
    $region16: #{clip_text_wrapper_forward.13} parent=1 // pred_region
      _
    $region17: #{clip_text_wrapper_forward.13} parent=1 // pred_fallthru
      _
    %v19 = vld [vmem:[%s0] sm:$0x1]
    %v20 = vunpack.c.l.bf16 %v19
    %vm21 = vcmask 254976
    %v22 = vsel %vm21, %v20, 0.0
    %23 = vadd.xlane.f32.xlu0 %v22
    %v24 = vpop.xlane.xlu0 %23
    %v25 = vrcp.pop 32.0
    %v26 = vmul.f32 %v24, %v25
    %v27 = vsub.f32 %v20, %v26
    %v28 = vmul.f32 %v27, %v27
    %v29 = vsel %vm21, %v28, 0.0
    %30 = vadd.xlane.f32.xlu0 %v29
    %v31 = vpop.xlane.xlu0 %30
    %v32 = vmul.f32 %v31, %v25
    %v33 = vadd.f32 %v32, 1e-05
    %v34 = vrsqrt.pop %v33
    %v35 = vmul.f32 %v27, %v34
    %v36 = vld [vmem:[%s1] sm:$0x1]
    %v38 = vlaneseq
    %v39 = vshrl.u32 %v38, 7
    %v40 = vsub.s32 0, %v39
    %v41 = vrot.slane %v36, %v40
    %v43 = vmul.f32 %v35, %v41
    %v44 = vld [vmem:[%s2] sm:$0x1]
    %v46 = vlaneseq
    %v47 = vshrl.u32 %v46, 7
    %v48 = vsub.s32 0, %v47
    %v49 = vrot.slane %v44, %v48
    %v51 = vadd.f32 %v43, %v49
    %v52 = vpack.c.bf16 %v51, %v51
    %v53 = vld [vmem:[%s3] sm:$0xf]
    %v54 = vld [vmem:[%s3 + $0x4] sm:$0xf]
    %v55 = vld [vmem:[%s3 + $0x8] sm:$0xf]
    %v56 = vld [vmem:[%s3 + $0xc] sm:$0xf]
    %v61 = vunpack.c.l.b16 %v53
    %v62 = vunpack.c.l.b16 %v54
    %v63 = vunpack.c.l.b16 %v55
    %v64 = vunpack.c.l.b16 %v56
    %v65 = vpack.c.b16 %v62, %v61
    %v66 = vpack.c.b16 %v64, %v63
    %vm69 = vcmask 261120
    %v71 = vsel %vm69, %v52, 0
    %73 = vmatprep.subr.bf16.mxu0 0
    %74 = vmatpush1.bf16.msra.mxu0 0
    %75 = vmatprep.subr.bf16.mxu0 0
    %76 = vmatpush1.bf16.msra.mxu0 0
    %77 = vmatprep.subr.bf16.mxu0 0
    %78 = vmatpush1.bf16.msra.mxu0 0
    %79 = vmatprep.subr.bf16.mxu0 0
    %80 = vmatpush1.bf16.msra.mxu0 0
    %81 = vmatprep.subr.bf16.mxu0 0
    %82 = vmatpush1.bf16.msra.mxu0 0
    %83 = vmatprep.subr.bf16.mxu0 0
    %84 = vmatpush1.bf16.msra.mxu0 0
    %85 = vmatprep.subr.bf16.mxu0 0
    %86 = vmatpush1.bf16.msra.mxu0 %v66
    %87 = vmatprep.subr.bf16.mxu0 0
    %88 = vmatpush1.bf16.msra.mxu0 %v65
    %89 = vmatprep.subr.bf16.mxu0 0
    %90 = vmatpush2.bf16.msra.mxu0 0
    %91 = vmatprep.subr.bf16.mxu0 0
    %92 = vmatpush2.bf16.msra.mxu0 0
    %93 = vmatprep.subr.bf16.mxu0 0
    %94 = vmatpush2.bf16.msra.mxu0 0
    %95 = vmatprep.subr.bf16.mxu0 0
    %96 = vmatpush2.bf16.msra.mxu0 0
    %97 = vmatprep.subr.bf16.mxu0 0
    %98 = vmatpush2.bf16.msra.mxu0 0
    %99 = vmatprep.subr.bf16.mxu0 0
    %100 = vmatpush2.bf16.msra.mxu0 0
    %101 = vmatprep.subr.bf16.mxu0 0
    %102 = vmatpush2.bf16.msra.mxu0 0
    %103 = vmatprep.subr.bf16.mxu0 0
    %104 = vmatpush2.bf16.msra.mxu0 0
    %105 = vmatprep.mubr.bf16.mxu0 0
    %106 = vmatmul.mubr.bf16.gmra.mxu0 %v71
    %v107 = vpop.f32.mrf.mxu0
    %v108 = vadd.f32 0.0, %v107
    %v109 = vpop.f32.mrf.mxu0
    %v110 = vpop.f32.mrf.mxu0
    %v111 = vpop.f32.mrf.mxu0
    %112 = vdwg.mxu0
    %v113 = vmul.f32 %v108, %v108
    %vm114 = vcmask 123904
    %v115 = vsel %vm114, %v113, 0.0
    %116 = vadd.xlane.f32.xlu0 %v115
    %v117 = vpop.xlane.xlu0 %116
    %v118 = vrsqrt.pop %v117
    %v119 = vmul.f32 %v117, %v118
    %vm120 = vcmp.eq.f32.partialorder %v117, inf
    %v121 = vsel %vm120, %v117, %v119
    %vm122 = vcmp.eq.f32.partialorder %v117, 0.0
    %v123 = vand.u32 %v117, 2147483648
    %v124 = vsel %vm122, %v123, %v121
    %v125 = vmax.f32 %v124, 1e-12
    %v126 = vrcp.pop %v125
    %v127 = vmul.f32 %v108, %v126
    %128 = vst.msk [vmem:[#allocation2] sm:$0x3] %vm114, %v127
    // Predicated region
    $region18: #{clip_text_wrapper_forward.13} parent=1 // pred_check
      _
    $region19: #{clip_text_wrapper_forward.13} parent=1 // pred_check_branch
      %130 = sbr.rel (0) target = $region21
    $region20: #{clip_text_wrapper_forward.13} parent=1 // pred_region
      %s132 = ssub.s32 32, 32
      %133 = vsyncadd [#allocation3], %s132
      %s135 = sshll.u32 [#allocation2], 4
      %s136 = int_to_ptr.vmem [resolvable:$true] %s135
      %138 = dma.vmem_to_hbm [thread:$0]  %s136, 32, %s4, [#allocation3]
    $region21: #{clip_text_wrapper_forward.13} parent=1 // pred_fallthru
      _
    // Predicated region
    $region22: #{clip_text_wrapper_forward.13} parent=1 // pred_check
      _
    $region23: #{clip_text_wrapper_forward.13} parent=1 // pred_check_branch
      %140 = sbr.rel (0) target = $region25
    $region24: #{clip_text_wrapper_forward.13} parent=1 // pred_region
      %141 = dma.done [#allocation3], 32
    $region25: #{clip_text_wrapper_forward.13} parent=1 // pred_fallthru
      _
    %142 = vsyncpa [#allocation3], 1

</llo_original>
